<compile_context>
chip_gen: v5e
topology: v5e:2x2
jax: 0.10.0
libtpu: 0.0.40
codegen_flags: <defaults>
</compile_context>

<pallas_src>
import jax
import jax.numpy as jnp
from jax.experimental import pallas as pl
from jax.experimental.pallas import tpu as pltpu


def _gumbel_decoder_kernel(thought_ref, gumbel_ref, emb_wi_ref, w_hh_ref,
                           w_out_ref, b_gates_ref, b_out_ref, utt_ref):
    Bb, E = thought_ref.shape
    T, _, V = gumbel_ref.shape

    # ---- weights (bf16, for the MXU), loaded once -------------------------
    ewi_r = emb_wi_ref[0]                      # [V, E]  emb_w @ W_ir^T (fused)
    ewi_z = emb_wi_ref[1]
    ewi_n = emb_wi_ref[2]
    wh_r = w_hh_ref[0]                         # [E, E]  W_hr^T
    wh_z = w_hh_ref[1]
    wh_n = w_hh_ref[2]
    w_out = w_out_ref[...]                     # [E, V]  W_out^T

    # ---- biases pre-broadcast to (Bb, .) ONCE (outside the unrolled loop) --
    b_r = jnp.broadcast_to(b_gates_ref[0:1, :], (Bb, E)).astype(jnp.float32)   # b_ir+b_hr
    b_z = jnp.broadcast_to(b_gates_ref[1:2, :], (Bb, E)).astype(jnp.float32)   # b_iz+b_hz
    b_in = jnp.broadcast_to(b_gates_ref[2:3, :], (Bb, E)).astype(jnp.float32)
    b_hn = jnp.broadcast_to(b_gates_ref[3:4, :], (Bb, E)).astype(jnp.float32)
    b_o = jnp.broadcast_to(b_out_ref[...], (Bb, V)).astype(jnp.float32)

    h = thought_ref[...].astype(jnp.float32)   # initial GRU hidden state [Bb, E]

    lane_v = jax.lax.broadcasted_iota(jnp.int32, (Bb, V), 1)        # 0..V-1
    lane_full = jax.lax.broadcasted_iota(jnp.int32, (Bb, T * V), 1)  # 0..T*V-1

    tb_bits = max(int(V - 1).bit_length(), 1)  # tie-break bits (index fits)
    tb_mask = (1 << tb_bits) - 1

    acc = jnp.zeros((Bb, T * V), jnp.float32)  # lane-dense output slab accumulator
    one_hot = None                             # previous token; x_0 is the zero start
    # TODO(synk): original ulfs decoder's exact start-token convention unknown;
    # zero start embedding is used here (so step 0's input path is bias-only).

    # T is small and everything is VMEM resident -> fully unrolled recurrence.
    for t in range(T):
        # ---- GRU cell (torch.nn.GRUCell math), per-gate matmuls ------------
        hb = h.astype(jnp.bfloat16)
        gh_r = jnp.dot(hb, wh_r, preferred_element_type=jnp.float32)
        gh_z = jnp.dot(hb, wh_z, preferred_element_type=jnp.float32)
        gh_n = jnp.dot(hb, wh_n, preferred_element_type=jnp.float32)

        if one_hot is None:                    # x_0 = 0 -> input path is bias only
            pre_r = gh_r + b_r
            pre_z = gh_z + b_z
            gi_n = b_in
        else:                                  # fused: one_hot @ (emb_w @ W_i^T)
            pre_r = jnp.dot(one_hot, ewi_r, preferred_element_type=jnp.float32) + gh_r + b_r
            pre_z = jnp.dot(one_hot, ewi_z, preferred_element_type=jnp.float32) + gh_z + b_z
            gi_n = jnp.dot(one_hot, ewi_n, preferred_element_type=jnp.float32) + b_in

        r = jax.nn.sigmoid(pre_r)
        z = jax.nn.sigmoid(pre_z)
        n = jnp.tanh(gi_n + r * (gh_n + b_hn))
        h = (1.0 - z) * n + z * h

        # ---- vocab logits ---------------------------------------------------
        logits = jnp.dot(h.astype(jnp.bfloat16), w_out,
                         preferred_element_type=jnp.float32) + b_o          # [Bb, V]

        # ---- hard gumbel-softmax forward value ------------------------------
        # gumbel_softmax(logits, tau, hard=True) forward == one_hot(argmax(y)),
        # y = logits + gumbel (softmax and 1/tau are strictly monotone).
        y = logits + gumbel_ref[t]                                           # [Bb, V]

        # Single cross-lane reduction argmax, lowest-index tie-break:
        # order-preserving f32->i32 key, low bits replaced by inverted lane idx.
        yi = pltpu.bitcast(y, jnp.int32)
        key = yi ^ ((yi >> 31) & jnp.int32(0x7FFFFFFF))       # monotone in y
        packed = (key & jnp.int32(~tb_mask)) | (jnp.int32(V - 1) - lane_v)
        packed_max = jnp.max(packed, axis=-1, keepdims=True)                 # [Bb, 1]
        one_hot = (packed == packed_max).astype(jnp.bfloat16)                # [Bb, V]

        # scatter token t into the [Bb, T*V] slab: pure VPU compare + select,
        # no lane movement.  argmax_lane = V-1 - low bits of packed_max.
        target = jnp.int32(t * V + V - 1) - (packed_max & jnp.int32(tb_mask))
        acc = jnp.where(lane_full == target, 1.0, acc)

    # single unmasked lane-dense store of the whole utterance slab
    utt_ref[...] = acc


def discrete_sender_forward(thought, kparams, gumbel_noise, *, tau,
                            utterance_max, block_b=None):
    """Returns (utterance [B, T, V], N [B] int32 lengths, 0)."""
    B, E = thought.shape
    V = kparams["b_out"].shape[-1]
    T = utterance_max

    # tau only rescales the soft distribution; the hard forward one-hot
    # (argmax of logits + gumbel) is independent of tau.
    del tau

    # Per-step noise indexed along a leading dim inside the kernel.
    assert gumbel_noise.shape == (B, T, V)
    gumbel_tbv = jnp.transpose(gumbel_noise, (1, 0, 2))        # [T, B, V]

    if block_b is None:
        block_b = B if B <= 512 else 512
    if block_b != B:
        assert B % block_b == 0 and block_b % 8 == 0
    grid = (B // block_b,)

    utt_flat = pl.pallas_call(
        _gumbel_decoder_kernel,
        out_shape=jax.ShapeDtypeStruct((B, T * V), jnp.float32),
        grid=grid,
        in_specs=[
            pl.BlockSpec((block_b, E), lambda i: (i, 0)),          # thought
            pl.BlockSpec((T, block_b, V), lambda i: (0, i, 0)),    # gumbel [T,B,V]
            pl.BlockSpec((3, V, E), lambda i: (0, 0, 0)),          # emb_wi (fused, bf16)
            pl.BlockSpec((3, E, E), lambda i: (0, 0, 0)),          # w_hh^T per gate (bf16)
            pl.BlockSpec((E, V), lambda i: (0, 0)),                # w_out^T (bf16)
            pl.BlockSpec((4, E), lambda i: (0, 0)),                # gate biases (f32)
            pl.BlockSpec((1, V), lambda i: (0, 0)),                # b_out (f32)
        ],
        out_specs=pl.BlockSpec((block_b, T * V), lambda i: (i, 0)),
        compiler_params=pltpu.CompilerParams(
            dimension_semantics=("parallel",)),   # v7x: split batch across 2 TCs
    )(thought, gumbel_tbv, kparams["emb_wi3"], kparams["w_hh3"],
      kparams["w_out_t"], kparams["b_gates"], kparams["b_out"])

    utterance = utt_flat.reshape(B, T, V)      # free reshape (T*V lane-dense slab)
    N = jnp.full((B,), T, dtype=jnp.int32)     # no_terminator=True
    return utterance, N, 0


def init_params(key, vocab_size, embedding_size):
    """Deterministic synthetic parameters in the PyTorch module's native layout."""
    V, E = vocab_size, embedding_size
    s = 1.0 / float(E) ** 0.5
    k = jax.random.split(key, 7)
    return dict(
        emb_w=jax.random.normal(k[0], (V, E), jnp.float32),              # nn.Embedding.weight
        w_ih=jax.random.uniform(k[1], (3 * E, E), jnp.float32, -s, s),   # GRUCell.weight_ih (r|z|n)
        w_hh=jax.random.uniform(k[2], (3 * E, E), jnp.float32, -s, s),   # GRUCell.weight_hh (r|z|n)
        b_ih=jax.random.uniform(k[3], (3 * E,), jnp.float32, -s, s),
        b_hh=jax.random.uniform(k[4], (3 * E,), jnp.float32, -s, s),
        w_out=jax.random.uniform(k[5], (V, E), jnp.float32, -s, s),      # Linear(E, V).weight
        b_out=jax.random.uniform(k[6], (V,), jnp.float32, -s, s),
    )


def prepare_params(p, vocab_size, embedding_size):
    """Kernel-friendly layout: pre-fused / pre-transposed / bf16 matmul weights."""
    V, E = vocab_size, embedding_size
    w_ih_t = p["w_ih"].T                       # [E, 3E]
    w_hh_t = p["w_hh"].T                       # [E, 3E]
    # Pre-fuse the token-embedding matmul into the input-gate weights:
    #   x_t = one_hot @ emb_w ;  gi = x_t @ W_i^T  ==>  gi = one_hot @ (emb_w @ W_i^T)
    emb_wi = p["emb_w"] @ w_ih_t               # [V, 3E]

    def split3(w):                             # (.., 3E) -> [3, .., E]
        return jnp.stack([w[..., 0:E], w[..., E:2 * E], w[..., 2 * E:3 * E]], axis=0)

    b_ih, b_hh = p["b_ih"], p["b_hh"]
    b_gates = jnp.stack([
        b_ih[0:E] + b_hh[0:E],                 # r gate: b_ir + b_hr (pre-summed)
        b_ih[E:2 * E] + b_hh[E:2 * E],         # z gate: b_iz + b_hz (pre-summed)
        b_ih[2 * E:3 * E],                     # b_in
        b_hh[2 * E:3 * E],                     # b_hn
    ], axis=0).astype(jnp.float32)             # [4, E]

    return dict(
        emb_wi3=split3(emb_wi).astype(jnp.bfloat16),       # [3, V, E]
        w_hh3=split3(w_hh_t).astype(jnp.bfloat16),         # [3, E, E]
        w_out_t=p["w_out"].T.astype(jnp.bfloat16),         # [E, V]
        b_gates=b_gates,                                   # [4, E] f32
        b_out=p["b_out"].reshape(1, V).astype(jnp.float32),
    )


if __name__ == "__main__":
    B, V, E, T = 2, 16, 32, 8
    tau = 1.2

    key = jax.random.PRNGKey(0)
    kp, kt, kg = jax.random.split(key, 3)

    raw_params = init_params(kp, V, E)
    kparams = prepare_params(raw_params, V, E)
    thought = jax.random.normal(kt, (B, E), jnp.float32)
    # Gumbel noise precomputed host-side for determinism (glue, not hot path).
    # TODO(synk): for large B, generate in-kernel with pltpu.prng_random_bits.
    gumbel = jax.random.gumbel(kg, (B, T, V), jnp.float32)

    utterance, N, zero = discrete_sender_forward(
        thought, kparams, gumbel, tau=tau, utterance_max=T)
    jax.block_until_ready((utterance, N))

    assert utterance.shape == (B, T, V)
    assert utterance.dtype == jnp.float32
    assert N.shape == (B,) and int(N[0]) == T and zero == 0
    # every emitted token is a valid one-hot
    assert bool(jnp.all(jnp.sum(utterance, axis=-1) == 1.0))
    assert bool(jnp.all((utterance == 0.0) | (utterance == 1.0)))

    print("KERNEL_OK")
</pallas_src>

<mosaic_0001>
module attributes {stable_mosaic.version = 11 : i64} {
  func.func @_gumbel_decoder_kernel(%arg0: i32, %arg1: memref<2x32xf32, #tpu.memory_space<vmem>>, %arg2: memref<8x2x16xf32, #tpu.memory_space<vmem>>, %arg3: memref<3x16x32xbf16, #tpu.memory_space<vmem>>, %arg4: memref<3x32x32xbf16, #tpu.memory_space<vmem>>, %arg5: memref<32x16xbf16, #tpu.memory_space<vmem>>, %arg6: memref<4x32xf32, #tpu.memory_space<vmem>>, %arg7: memref<1x16xf32, #tpu.memory_space<vmem>>, %arg8: memref<2x128xf32, #tpu.memory_space<vmem>>) attributes {dimension_semantics = [#tpu.dimension_semantics<parallel>], iteration_bounds = array<i64: 1>, scalar_prefetch = 0 : i64, scratch_operands = 0 : i64, tpu.core_type = #tpu.core_type<tc>, window_params = [{transform_indices = @transform_0, window_bounds = array<i64: 2, 32>}, {transform_indices = @transform_1, window_bounds = array<i64: 8, 2, 16>}, {pipeline_mode = #tpu.pipeline_mode<synchronous>, transform_indices = @transform_2, window_bounds = array<i64: 3, 16, 32>}, {pipeline_mode = #tpu.pipeline_mode<synchronous>, transform_indices = @transform_3, window_bounds = array<i64: 3, 32, 32>}, {pipeline_mode = #tpu.pipeline_mode<synchronous>, transform_indices = @transform_4, window_bounds = array<i64: 32, 16>}, {pipeline_mode = #tpu.pipeline_mode<synchronous>, transform_indices = @transform_5, window_bounds = array<i64: 4, 32>}, {pipeline_mode = #tpu.pipeline_mode<synchronous>, transform_indices = @transform_6, window_bounds = array<i64: 1, 16>}, {transform_indices = @transform_7, window_bounds = array<i64: 2, 128>}]} {
    %c0 = arith.constant 0 : index
    %c0_0 = arith.constant 0 : index
    %c0_1 = arith.constant 0 : index
    %0 = vector.load %arg3[%c0, %c0_0, %c0_1] : memref<3x16x32xbf16, #tpu.memory_space<vmem>>, vector<1x16x32xbf16>
    %1 = vector.shape_cast %0 : vector<1x16x32xbf16> to vector<16x32xbf16>
    %c1 = arith.constant 1 : index
    %c0_2 = arith.constant 0 : index
    %c0_3 = arith.constant 0 : index
    %2 = vector.load %arg3[%c1, %c0_2, %c0_3] : memref<3x16x32xbf16, #tpu.memory_space<vmem>>, vector<1x16x32xbf16>
    %3 = vector.shape_cast %2 : vector<1x16x32xbf16> to vector<16x32xbf16>
    %c2 = arith.constant 2 : index
    %c0_4 = arith.constant 0 : index
    %c0_5 = arith.constant 0 : index
    %4 = vector.load %arg3[%c2, %c0_4, %c0_5] : memref<3x16x32xbf16, #tpu.memory_space<vmem>>, vector<1x16x32xbf16>
    %5 = vector.shape_cast %4 : vector<1x16x32xbf16> to vector<16x32xbf16>
    %c0_6 = arith.constant 0 : index
    %c0_7 = arith.constant 0 : index
    %c0_8 = arith.constant 0 : index
    %6 = vector.load %arg4[%c0_6, %c0_7, %c0_8] : memref<3x32x32xbf16, #tpu.memory_space<vmem>>, vector<1x32x32xbf16>
    %7 = vector.shape_cast %6 : vector<1x32x32xbf16> to vector<32x32xbf16>
    %c1_9 = arith.constant 1 : index
    %c0_10 = arith.constant 0 : index
    %c0_11 = arith.constant 0 : index
    %8 = vector.load %arg4[%c1_9, %c0_10, %c0_11] : memref<3x32x32xbf16, #tpu.memory_space<vmem>>, vector<1x32x32xbf16>
    %9 = vector.shape_cast %8 : vector<1x32x32xbf16> to vector<32x32xbf16>
    %c2_12 = arith.constant 2 : index
    %c0_13 = arith.constant 0 : index
    %c0_14 = arith.constant 0 : index
    %10 = vector.load %arg4[%c2_12, %c0_13, %c0_14] : memref<3x32x32xbf16, #tpu.memory_space<vmem>>, vector<1x32x32xbf16>
    %11 = vector.shape_cast %10 : vector<1x32x32xbf16> to vector<32x32xbf16>
    %c0_15 = arith.constant 0 : index
    %c0_16 = arith.constant 0 : index
    %12 = vector.load %arg5[%c0_15, %c0_16] : memref<32x16xbf16, #tpu.memory_space<vmem>>, vector<32x16xbf16>
    %c0_17 = arith.constant 0 : index
    %c0_18 = arith.constant 0 : index
    %13 = vector.load %arg6[%c0_17, %c0_18] : memref<4x32xf32, #tpu.memory_space<vmem>>, vector<1x32xf32>
    %14 = vector.shape_cast %13 : vector<1x32xf32> to vector<1x32xf32>
    %15 = vector.broadcast %14 : vector<1x32xf32> to vector<2x32xf32>
    %c1_19 = arith.constant 1 : index
    %c0_20 = arith.constant 0 : index
    %16 = vector.load %arg6[%c1_19, %c0_20] : memref<4x32xf32, #tpu.memory_space<vmem>>, vector<1x32xf32>
    %17 = vector.shape_cast %16 : vector<1x32xf32> to vector<1x32xf32>
    %18 = vector.broadcast %17 : vector<1x32xf32> to vector<2x32xf32>
    %c2_21 = arith.constant 2 : index
    %c0_22 = arith.constant 0 : index
    %19 = vector.load %arg6[%c2_21, %c0_22] : memref<4x32xf32, #tpu.memory_space<vmem>>, vector<1x32xf32>
    %20 = vector.shape_cast %19 : vector<1x32xf32> to vector<1x32xf32>
    %21 = vector.broadcast %20 : vector<1x32xf32> to vector<2x32xf32>
    %c3 = arith.constant 3 : index
    %c0_23 = arith.constant 0 : index
    %22 = vector.load %arg6[%c3, %c0_23] : memref<4x32xf32, #tpu.memory_space<vmem>>, vector<1x32xf32>
    %23 = vector.shape_cast %22 : vector<1x32xf32> to vector<1x32xf32>
    %24 = vector.broadcast %23 : vector<1x32xf32> to vector<2x32xf32>
    %c0_24 = arith.constant 0 : index
    %c0_25 = arith.constant 0 : index
    %25 = vector.load %arg7[%c0_24, %c0_25] : memref<1x16xf32, #tpu.memory_space<vmem>>, vector<1x16xf32>
    %26 = vector.shape_cast %25 : vector<1x16xf32> to vector<1x16xf32>
    %27 = vector.broadcast %26 : vector<1x16xf32> to vector<2x16xf32>
    %c0_26 = arith.constant 0 : index
    %c0_27 = arith.constant 0 : index
    %28 = vector.load %arg1[%c0_26, %c0_27] : memref<2x32xf32, #tpu.memory_space<vmem>>, vector<2x32xf32>
    %29 = tpu.iota {dimensions = array<i32: 1>} : vector<2x16xi32>
    %30 = tpu.iota {dimensions = array<i32: 1>} : vector<2x128xi32>
    %cst = arith.constant 0.000000e+00 : f32
    %31 = vector.broadcast %cst : f32 to vector<2x128xf32>
    %32 = arith.truncf %28 : vector<2x32xf32> to vector<2x32xbf16>
    %cst_28 = arith.constant dense<0.000000e+00> : vector<2x32xf32>
    %33 = tpu.matmul %32, %7, %cst_28 {dimension_numbers = #tpu.dot_dimension_numbers<[1], [0], [0], [1], [0, 0, 1, 1], [], []>} : vector<2x32xbf16>, vector<32x32xbf16>, vector<2x32xf32> -> vector<2x32xf32>
    %cst_29 = arith.constant dense<0.000000e+00> : vector<2x32xf32>
    %34 = tpu.matmul %32, %9, %cst_29 {dimension_numbers = #tpu.dot_dimension_numbers<[1], [0], [0], [1], [0, 0, 1, 1], [], []>} : vector<2x32xbf16>, vector<32x32xbf16>, vector<2x32xf32> -> vector<2x32xf32>
    %cst_30 = arith.constant dense<0.000000e+00> : vector<2x32xf32>
    %35 = tpu.matmul %32, %11, %cst_30 {dimension_numbers = #tpu.dot_dimension_numbers<[1], [0], [0], [1], [0, 0, 1, 1], [], []>} : vector<2x32xbf16>, vector<32x32xbf16>, vector<2x32xf32> -> vector<2x32xf32>
    %36 = arith.addf %33, %15 : vector<2x32xf32>
    %37 = arith.addf %34, %18 : vector<2x32xf32>
    %38 = arith.negf %36 : vector<2x32xf32>
    %39 = math.exp %38 : vector<2x32xf32>
    %cst_31 = arith.constant 1.000000e+00 : f32
    %40 = vector.broadcast %cst_31 : f32 to vector<2x32xf32>
    %41 = arith.addf %40, %39 : vector<2x32xf32>
    %42 = arith.divf %40, %41 : vector<2x32xf32>
    %43 = arith.negf %37 : vector<2x32xf32>
    %44 = math.exp %43 : vector<2x32xf32>
    %cst_32 = arith.constant 1.000000e+00 : f32
    %45 = vector.broadcast %cst_32 : f32 to vector<2x32xf32>
    %46 = arith.addf %45, %44 : vector<2x32xf32>
    %47 = arith.divf %45, %46 : vector<2x32xf32>
    %48 = arith.addf %35, %24 : vector<2x32xf32>
    %49 = arith.mulf %42, %48 : vector<2x32xf32>
    %50 = arith.addf %21, %49 : vector<2x32xf32>
    %51 = math.tanh %50 : vector<2x32xf32>
    %cst_33 = arith.constant 1.000000e+00 : f32
    %52 = vector.broadcast %cst_33 : f32 to vector<2x32xf32>
    %53 = arith.subf %52, %47 : vector<2x32xf32>
    %54 = arith.mulf %53, %51 : vector<2x32xf32>
    %55 = arith.mulf %47, %28 : vector<2x32xf32>
    %56 = arith.addf %54, %55 : vector<2x32xf32>
    %57 = arith.truncf %56 : vector<2x32xf32> to vector<2x32xbf16>
    %cst_34 = arith.constant dense<0.000000e+00> : vector<2x16xf32>
    %58 = tpu.matmul %57, %12, %cst_34 {dimension_numbers = #tpu.dot_dimension_numbers<[1], [0], [0], [1], [0, 0, 1, 1], [], []>} : vector<2x32xbf16>, vector<32x16xbf16>, vector<2x16xf32> -> vector<2x16xf32>
    %59 = arith.addf %58, %27 : vector<2x16xf32>
    %c0_35 = arith.constant 0 : index
    %c0_36 = arith.constant 0 : index
    %c0_37 = arith.constant 0 : index
    %60 = vector.load %arg2[%c0_35, %c0_36, %c0_37] : memref<8x2x16xf32, #tpu.memory_space<vmem>>, vector<1x2x16xf32>
    %61 = vector.shape_cast %60 : vector<1x2x16xf32> to vector<2x16xf32>
    %62 = arith.addf %59, %61 : vector<2x16xf32>
    %63 = tpu.bitcast %62 : vector<2x16xf32> -> vector<2x16xi32>
    %c31_i32 = arith.constant 31 : i32
    %64 = vector.broadcast %c31_i32 : i32 to vector<2x16xi32>
    %65 = arith.shrsi %63, %64 : vector<2x16xi32>
    %c2147483647_i32 = arith.constant 2147483647 : i32
    %66 = vector.broadcast %c2147483647_i32 : i32 to vector<2x16xi32>
    %67 = arith.andi %65, %66 : vector<2x16xi32>
    %68 = arith.xori %63, %67 : vector<2x16xi32>
    %c-16_i32 = arith.constant -16 : i32
    %69 = vector.broadcast %c-16_i32 : i32 to vector<2x16xi32>
    %70 = arith.andi %68, %69 : vector<2x16xi32>
    %c15_i32 = arith.constant 15 : i32
    %71 = vector.broadcast %c15_i32 : i32 to vector<2x16xi32>
    %72 = arith.subi %71, %29 : vector<2x16xi32>
    %73 = arith.ori %70, %72 : vector<2x16xi32>
    %cst_38 = arith.constant dense<-2147483648> : vector<2xi32>
    %74 = vector.multi_reduction <maxsi>, %73, %cst_38 [1] : vector<2x16xi32> to vector<2xi32>
    %75 = vector.shape_cast %74 : vector<2xi32> to vector<2x1xi32>
    %76 = vector.broadcast %75 : vector<2x1xi32> to vector<2x16xi32>
    %77 = arith.cmpi eq, %73, %76 : vector<2x16xi32>
    %78 = arith.extui %77 : vector<2x16xi1> to vector<2x16xi32>
    %79 = arith.sitofp %78 : vector<2x16xi32> to vector<2x16xf32>
    %80 = arith.truncf %79 : vector<2x16xf32> to vector<2x16xbf16>
    %c15_i32_39 = arith.constant 15 : i32
    %81 = vector.broadcast %c15_i32_39 : i32 to vector<2x1xi32>
    %82 = arith.andi %75, %81 : vector<2x1xi32>
    %c15_i32_40 = arith.constant 15 : i32
    %83 = vector.broadcast %c15_i32_40 : i32 to vector<2x1xi32>
    %84 = arith.subi %83, %82 : vector<2x1xi32>
    %85 = vector.broadcast %84 : vector<2x1xi32> to vector<2x128xi32>
    %86 = arith.cmpi eq, %30, %85 : vector<2x128xi32>
    %cst_41 = arith.constant 1.000000e+00 : f32
    %87 = vector.broadcast %cst_41 : f32 to vector<2x128xf32>
    %88 = arith.select %86, %87, %31 : vector<2x128xi1>, vector<2x128xf32>
    %89 = arith.truncf %56 : vector<2x32xf32> to vector<2x32xbf16>
    %cst_42 = arith.constant dense<0.000000e+00> : vector<2x32xf32>
    %90 = tpu.matmul %89, %7, %cst_42 {dimension_numbers = #tpu.dot_dimension_numbers<[1], [0], [0], [1], [0, 0, 1, 1], [], []>} : vector<2x32xbf16>, vector<32x32xbf16>, vector<2x32xf32> -> vector<2x32xf32>
    %cst_43 = arith.constant dense<0.000000e+00> : vector<2x32xf32>
    %91 = tpu.matmul %89, %9, %cst_43 {dimension_numbers = #tpu.dot_dimension_numbers<[1], [0], [0], [1], [0, 0, 1, 1], [], []>} : vector<2x32xbf16>, vector<32x32xbf16>, vector<2x32xf32> -> vector<2x32xf32>
    %cst_44 = arith.constant dense<0.000000e+00> : vector<2x32xf32>
    %92 = tpu.matmul %89, %11, %cst_44 {dimension_numbers = #tpu.dot_dimension_numbers<[1], [0], [0], [1], [0, 0, 1, 1], [], []>} : vector<2x32xbf16>, vector<32x32xbf16>, vector<2x32xf32> -> vector<2x32xf32>
    %cst_45 = arith.constant dense<0.000000e+00> : vector<2x32xf32>
    %93 = tpu.matmul %80, %1, %cst_45 {dimension_numbers = #tpu.dot_dimension_numbers<[1], [0], [0], [1], [0, 0, 1, 1], [], []>} : vector<2x16xbf16>, vector<16x32xbf16>, vector<2x32xf32> -> vector<2x32xf32>
    %94 = arith.addf %93, %90 : vector<2x32xf32>
    %95 = arith.addf %94, %15 : vector<2x32xf32>
    %cst_46 = arith.constant dense<0.000000e+00> : vector<2x32xf32>
    %96 = tpu.matmul %80, %3, %cst_46 {dimension_numbers = #tpu.dot_dimension_numbers<[1], [0], [0], [1], [0, 0, 1, 1], [], []>} : vector<2x16xbf16>, vector<16x32xbf16>, vector<2x32xf32> -> vector<2x32xf32>
    %97 = arith.addf %96, %91 : vector<2x32xf32>
    %98 = arith.addf %97, %18 : vector<2x32xf32>
    %cst_47 = arith.constant dense<0.000000e+00> : vector<2x32xf32>
    %99 = tpu.matmul %80, %5, %cst_47 {dimension_numbers = #tpu.dot_dimension_numbers<[1], [0], [0], [1], [0, 0, 1, 1], [], []>} : vector<2x16xbf16>, vector<16x32xbf16>, vector<2x32xf32> -> vector<2x32xf32>
    %100 = arith.addf %99, %21 : vector<2x32xf32>
    %101 = arith.negf %95 : vector<2x32xf32>
    %102 = math.exp %101 : vector<2x32xf32>
    %cst_48 = arith.constant 1.000000e+00 : f32
    %103 = vector.broadcast %cst_48 : f32 to vector<2x32xf32>
    %104 = arith.addf %103, %102 : vector<2x32xf32>
    %105 = arith.divf %103, %104 : vector<2x32xf32>
    %106 = arith.negf %98 : vector<2x32xf32>
    %107 = math.exp %106 : vector<2x32xf32>
    %cst_49 = arith.constant 1.000000e+00 : f32
    %108 = vector.broadcast %cst_49 : f32 to vector<2x32xf32>
    %109 = arith.addf %108, %107 : vector<2x32xf32>
    %110 = arith.divf %108, %109 : vector<2x32xf32>
    %111 = arith.addf %92, %24 : vector<2x32xf32>
    %112 = arith.mulf %105, %111 : vector<2x32xf32>
    %113 = arith.addf %100, %112 : vector<2x32xf32>
    %114 = math.tanh %113 : vector<2x32xf32>
    %cst_50 = arith.constant 1.000000e+00 : f32
    %115 = vector.broadcast %cst_50 : f32 to vector<2x32xf32>
    %116 = arith.subf %115, %110 : vector<2x32xf32>
    %117 = arith.mulf %116, %114 : vector<2x32xf32>
    %118 = arith.mulf %110, %56 : vector<2x32xf32>
    %119 = arith.addf %117, %118 : vector<2x32xf32>
    %120 = arith.truncf %119 : vector<2x32xf32> to vector<2x32xbf16>
    %cst_51 = arith.constant dense<0.000000e+00> : vector<2x16xf32>
    %121 = tpu.matmul %120, %12, %cst_51 {dimension_numbers = #tpu.dot_dimension_numbers<[1], [0], [0], [1], [0, 0, 1, 1], [], []>} : vector<2x32xbf16>, vector<32x16xbf16>, vector<2x16xf32> -> vector<2x16xf32>
    %122 = arith.addf %121, %27 : vector<2x16xf32>
    %c1_52 = arith.constant 1 : index
    %c0_53 = arith.constant 0 : index
    %c0_54 = arith.constant 0 : index
    %123 = vector.load %arg2[%c1_52, %c0_53, %c0_54] : memref<8x2x16xf32, #tpu.memory_space<vmem>>, vector<1x2x16xf32>
    %124 = vector.shape_cast %123 : vector<1x2x16xf32> to vector<2x16xf32>
    %125 = arith.addf %122, %124 : vector<2x16xf32>
    %126 = tpu.bitcast %125 : vector<2x16xf32> -> vector<2x16xi32>
    %c31_i32_55 = arith.constant 31 : i32
    %127 = vector.broadcast %c31_i32_55 : i32 to vector<2x16xi32>
    %128 = arith.shrsi %126, %127 : vector<2x16xi32>
    %c2147483647_i32_56 = arith.constant 2147483647 : i32
    %129 = vector.broadcast %c2147483647_i32_56 : i32 to vector<2x16xi32>
    %130 = arith.andi %128, %129 : vector<2x16xi32>
    %131 = arith.xori %126, %130 : vector<2x16xi32>
    %c-16_i32_57 = arith.constant -16 : i32
    %132 = vector.broadcast %c-16_i32_57 : i32 to vector<2x16xi32>
    %133 = arith.andi %131, %132 : vector<2x16xi32>
    %c15_i32_58 = arith.constant 15 : i32
    %134 = vector.broadcast %c15_i32_58 : i32 to vector<2x16xi32>
    %135 = arith.subi %134, %29 : vector<2x16xi32>
    %136 = arith.ori %133, %135 : vector<2x16xi32>
    %cst_59 = arith.constant dense<-2147483648> : vector<2xi32>
    %137 = vector.multi_reduction <maxsi>, %136, %cst_59 [1] : vector<2x16xi32> to vector<2xi32>
    %138 = vector.shape_cast %137 : vector<2xi32> to vector<2x1xi32>
    %139 = vector.broadcast %138 : vector<2x1xi32> to vector<2x16xi32>
    %140 = arith.cmpi eq, %136, %139 : vector<2x16xi32>
    %141 = arith.extui %140 : vector<2x16xi1> to vector<2x16xi32>
    %142 = arith.sitofp %141 : vector<2x16xi32> to vector<2x16xf32>
    %143 = arith.truncf %142 : vector<2x16xf32> to vector<2x16xbf16>
    %c15_i32_60 = arith.constant 15 : i32
    %144 = vector.broadcast %c15_i32_60 : i32 to vector<2x1xi32>
    %145 = arith.andi %138, %144 : vector<2x1xi32>
    %c31_i32_61 = arith.constant 31 : i32
    %146 = vector.broadcast %c31_i32_61 : i32 to vector<2x1xi32>
    %147 = arith.subi %146, %145 : vector<2x1xi32>
    %148 = vector.broadcast %147 : vector<2x1xi32> to vector<2x128xi32>
    %149 = arith.cmpi eq, %30, %148 : vector<2x128xi32>
    %cst_62 = arith.constant 1.000000e+00 : f32
    %150 = vector.broadcast %cst_62 : f32 to vector<2x128xf32>
    %151 = arith.select %149, %150, %88 : vector<2x128xi1>, vector<2x128xf32>
    %152 = arith.truncf %119 : vector<2x32xf32> to vector<2x32xbf16>
    %cst_63 = arith.constant dense<0.000000e+00> : vector<2x32xf32>
    %153 = tpu.matmul %152, %7, %cst_63 {dimension_numbers = #tpu.dot_dimension_numbers<[1], [0], [0], [1], [0, 0, 1, 1], [], []>} : vector<2x32xbf16>, vector<32x32xbf16>, vector<2x32xf32> -> vector<2x32xf32>
    %cst_64 = arith.constant dense<0.000000e+00> : vector<2x32xf32>
    %154 = tpu.matmul %152, %9, %cst_64 {dimension_numbers = #tpu.dot_dimension_numbers<[1], [0], [0], [1], [0, 0, 1, 1], [], []>} : vector<2x32xbf16>, vector<32x32xbf16>, vector<2x32xf32> -> vector<2x32xf32>
    %cst_65 = arith.constant dense<0.000000e+00> : vector<2x32xf32>
    %155 = tpu.matmul %152, %11, %cst_65 {dimension_numbers = #tpu.dot_dimension_numbers<[1], [0], [0], [1], [0, 0, 1, 1], [], []>} : vector<2x32xbf16>, vector<32x32xbf16>, vector<2x32xf32> -> vector<2x32xf32>
    %cst_66 = arith.constant dense<0.000000e+00> : vector<2x32xf32>
    %156 = tpu.matmul %143, %1, %cst_66 {dimension_numbers = #tpu.dot_dimension_numbers<[1], [0], [0], [1], [0, 0, 1, 1], [], []>} : vector<2x16xbf16>, vector<16x32xbf16>, vector<2x32xf32> -> vector<2x32xf32>
    %157 = arith.addf %156, %153 : vector<2x32xf32>
    %158 = arith.addf %157, %15 : vector<2x32xf32>
    %cst_67 = arith.constant dense<0.000000e+00> : vector<2x32xf32>
    %159 = tpu.matmul %143, %3, %cst_67 {dimension_numbers = #tpu.dot_dimension_numbers<[1], [0], [0], [1], [0, 0, 1, 1], [], []>} : vector<2x16xbf16>, vector<16x32xbf16>, vector<2x32xf32> -> vector<2x32xf32>
    %160 = arith.addf %159, %154 : vector<2x32xf32>
    %161 = arith.addf %160, %18 : vector<2x32xf32>
    %cst_68 = arith.constant dense<0.000000e+00> : vector<2x32xf32>
    %162 = tpu.matmul %143, %5, %cst_68 {dimension_numbers = #tpu.dot_dimension_numbers<[1], [0], [0], [1], [0, 0, 1, 1], [], []>} : vector<2x16xbf16>, vector<16x32xbf16>, vector<2x32xf32> -> vector<2x32xf32>
    %163 = arith.addf %162, %21 : vector<2x32xf32>
    %164 = arith.negf %158 : vector<2x32xf32>
    %165 = math.exp %164 : vector<2x32xf32>
    %cst_69 = arith.constant 1.000000e+00 : f32
    %166 = vector.broadcast %cst_69 : f32 to vector<2x32xf32>
    %167 = arith.addf %166, %165 : vector<2x32xf32>
    %168 = arith.divf %166, %167 : vector<2x32xf32>
    %169 = arith.negf %161 : vector<2x32xf32>
    %170 = math.exp %169 : vector<2x32xf32>
    %cst_70 = arith.constant 1.000000e+00 : f32
    %171 = vector.broadcast %cst_70 : f32 to vector<2x32xf32>
    %172 = arith.addf %171, %170 : vector<2x32xf32>
    %173 = arith.divf %171, %172 : vector<2x32xf32>
    %174 = arith.addf %155, %24 : vector<2x32xf32>
    %175 = arith.mulf %168, %174 : vector<2x32xf32>
    %176 = arith.addf %163, %175 : vector<2x32xf32>
    %177 = math.tanh %176 : vector<2x32xf32>
    %cst_71 = arith.constant 1.000000e+00 : f32
    %178 = vector.broadcast %cst_71 : f32 to vector<2x32xf32>
    %179 = arith.subf %178, %173 : vector<2x32xf32>
    %180 = arith.mulf %179, %177 : vector<2x32xf32>
    %181 = arith.mulf %173, %119 : vector<2x32xf32>
    %182 = arith.addf %180, %181 : vector<2x32xf32>
    %183 = arith.truncf %182 : vector<2x32xf32> to vector<2x32xbf16>
    %cst_72 = arith.constant dense<0.000000e+00> : vector<2x16xf32>
    %184 = tpu.matmul %183, %12, %cst_72 {dimension_numbers = #tpu.dot_dimension_numbers<[1], [0], [0], [1], [0, 0, 1, 1], [], []>} : vector<2x32xbf16>, vector<32x16xbf16>, vector<2x16xf32> -> vector<2x16xf32>
    %185 = arith.addf %184, %27 : vector<2x16xf32>
    %c2_73 = arith.constant 2 : index
    %c0_74 = arith.constant 0 : index
    %c0_75 = arith.constant 0 : index
    %186 = vector.load %arg2[%c2_73, %c0_74, %c0_75] : memref<8x2x16xf32, #tpu.memory_space<vmem>>, vector<1x2x16xf32>
    %187 = vector.shape_cast %186 : vector<1x2x16xf32> to vector<2x16xf32>
    %188 = arith.addf %185, %187 : vector<2x16xf32>
    %189 = tpu.bitcast %188 : vector<2x16xf32> -> vector<2x16xi32>
    %c31_i32_76 = arith.constant 31 : i32
    %190 = vector.broadcast %c31_i32_76 : i32 to vector<2x16xi32>
    %191 = arith.shrsi %189, %190 : vector<2x16xi32>
    %c2147483647_i32_77 = arith.constant 2147483647 : i32
    %192 = vector.broadcast %c2147483647_i32_77 : i32 to vector<2x16xi32>
    %193 = arith.andi %191, %192 : vector<2x16xi32>
    %194 = arith.xori %189, %193 : vector<2x16xi32>
    %c-16_i32_78 = arith.constant -16 : i32
    %195 = vector.broadcast %c-16_i32_78 : i32 to vector<2x16xi32>
    %196 = arith.andi %194, %195 : vector<2x16xi32>
    %c15_i32_79 = arith.constant 15 : i32
    %197 = vector.broadcast %c15_i32_79 : i32 to vector<2x16xi32>
    %198 = arith.subi %197, %29 : vector<2x16xi32>
    %199 = arith.ori %196, %198 : vector<2x16xi32>
    %cst_80 = arith.constant dense<-2147483648> : vector<2xi32>
    %200 = vector.multi_reduction <maxsi>, %199, %cst_80 [1] : vector<2x16xi32> to vector<2xi32>
    %201 = vector.shape_cast %200 : vector<2xi32> to vector<2x1xi32>
    %202 = vector.broadcast %201 : vector<2x1xi32> to vector<2x16xi32>
    %203 = arith.cmpi eq, %199, %202 : vector<2x16xi32>
    %204 = arith.extui %203 : vector<2x16xi1> to vector<2x16xi32>
    %205 = arith.sitofp %204 : vector<2x16xi32> to vector<2x16xf32>
    %206 = arith.truncf %205 : vector<2x16xf32> to vector<2x16xbf16>
    %c15_i32_81 = arith.constant 15 : i32
    %207 = vector.broadcast %c15_i32_81 : i32 to vector<2x1xi32>
    %208 = arith.andi %201, %207 : vector<2x1xi32>
    %c47_i32 = arith.constant 47 : i32
    %209 = vector.broadcast %c47_i32 : i32 to vector<2x1xi32>
    %210 = arith.subi %209, %208 : vector<2x1xi32>
    %211 = vector.broadcast %210 : vector<2x1xi32> to vector<2x128xi32>
    %212 = arith.cmpi eq, %30, %211 : vector<2x128xi32>
    %cst_82 = arith.constant 1.000000e+00 : f32
    %213 = vector.broadcast %cst_82 : f32 to vector<2x128xf32>
    %214 = arith.select %212, %213, %151 : vector<2x128xi1>, vector<2x128xf32>
    %215 = arith.truncf %182 : vector<2x32xf32> to vector<2x32xbf16>
    %cst_83 = arith.constant dense<0.000000e+00> : vector<2x32xf32>
    %216 = tpu.matmul %215, %7, %cst_83 {dimension_numbers = #tpu.dot_dimension_numbers<[1], [0], [0], [1], [0, 0, 1, 1], [], []>} : vector<2x32xbf16>, vector<32x32xbf16>, vector<2x32xf32> -> vector<2x32xf32>
    %cst_84 = arith.constant dense<0.000000e+00> : vector<2x32xf32>
    %217 = tpu.matmul %215, %9, %cst_84 {dimension_numbers = #tpu.dot_dimension_numbers<[1], [0], [0], [1], [0, 0, 1, 1], [], []>} : vector<2x32xbf16>, vector<32x32xbf16>, vector<2x32xf32> -> vector<2x32xf32>
    %cst_85 = arith.constant dense<0.000000e+00> : vector<2x32xf32>
    %218 = tpu.matmul %215, %11, %cst_85 {dimension_numbers = #tpu.dot_dimension_numbers<[1], [0], [0], [1], [0, 0, 1, 1], [], []>} : vector<2x32xbf16>, vector<32x32xbf16>, vector<2x32xf32> -> vector<2x32xf32>
    %cst_86 = arith.constant dense<0.000000e+00> : vector<2x32xf32>
    %219 = tpu.matmul %206, %1, %cst_86 {dimension_numbers = #tpu.dot_dimension_numbers<[1], [0], [0], [1], [0, 0, 1, 1], [], []>} : vector<2x16xbf16>, vector<16x32xbf16>, vector<2x32xf32> -> vector<2x32xf32>
    %220 = arith.addf %219, %216 : vector<2x32xf32>
    %221 = arith.addf %220, %15 : vector<2x32xf32>
    %cst_87 = arith.constant dense<0.000000e+00> : vector<2x32xf32>
    %222 = tpu.matmul %206, %3, %cst_87 {dimension_numbers = #tpu.dot_dimension_numbers<[1], [0], [0], [1], [0, 0, 1, 1], [], []>} : vector<2x16xbf16>, vector<16x32xbf16>, vector<2x32xf32> -> vector<2x32xf32>
    %223 = arith.addf %222, %217 : vector<2x32xf32>
    %224 = arith.addf %223, %18 : vector<2x32xf32>
    %cst_88 = arith.constant dense<0.000000e+00> : vector<2x32xf32>
    %225 = tpu.matmul %206, %5, %cst_88 {dimension_numbers = #tpu.dot_dimension_numbers<[1], [0], [0], [1], [0, 0, 1, 1], [], []>} : vector<2x16xbf16>, vector<16x32xbf16>, vector<2x32xf32> -> vector<2x32xf32>
    %226 = arith.addf %225, %21 : vector<2x32xf32>
    %227 = arith.negf %221 : vector<2x32xf32>
    %228 = math.exp %227 : vector<2x32xf32>
    %cst_89 = arith.constant 1.000000e+00 : f32
    %229 = vector.broadcast %cst_89 : f32 to vector<2x32xf32>
    %230 = arith.addf %229, %228 : vector<2x32xf32>
    %231 = arith.divf %229, %230 : vector<2x32xf32>
    %232 = arith.negf %224 : vector<2x32xf32>
    %233 = math.exp %232 : vector<2x32xf32>
    %cst_90 = arith.constant 1.000000e+00 : f32
    %234 = vector.broadcast %cst_90 : f32 to vector<2x32xf32>
    %235 = arith.addf %234, %233 : vector<2x32xf32>
    %236 = arith.divf %234, %235 : vector<2x32xf32>
    %237 = arith.addf %218, %24 : vector<2x32xf32>
    %238 = arith.mulf %231, %237 : vector<2x32xf32>
    %239 = arith.addf %226, %238 : vector<2x32xf32>
    %240 = math.tanh %239 : vector<2x32xf32>
    %cst_91 = arith.constant 1.000000e+00 : f32
    %241 = vector.broadcast %cst_91 : f32 to vector<2x32xf32>
    %242 = arith.subf %241, %236 : vector<2x32xf32>
    %243 = arith.mulf %242, %240 : vector<2x32xf32>
    %244 = arith.mulf %236, %182 : vector<2x32xf32>
    %245 = arith.addf %243, %244 : vector<2x32xf32>
    %246 = arith.truncf %245 : vector<2x32xf32> to vector<2x32xbf16>
    %cst_92 = arith.constant dense<0.000000e+00> : vector<2x16xf32>
    %247 = tpu.matmul %246, %12, %cst_92 {dimension_numbers = #tpu.dot_dimension_numbers<[1], [0], [0], [1], [0, 0, 1, 1], [], []>} : vector<2x32xbf16>, vector<32x16xbf16>, vector<2x16xf32> -> vector<2x16xf32>
    %248 = arith.addf %247, %27 : vector<2x16xf32>
    %c3_93 = arith.constant 3 : index
    %c0_94 = arith.constant 0 : index
    %c0_95 = arith.constant 0 : index
    %249 = vector.load %arg2[%c3_93, %c0_94, %c0_95] : memref<8x2x16xf32, #tpu.memory_space<vmem>>, vector<1x2x16xf32>
    %250 = vector.shape_cast %249 : vector<1x2x16xf32> to vector<2x16xf32>
    %251 = arith.addf %248, %250 : vector<2x16xf32>
    %252 = tpu.bitcast %251 : vector<2x16xf32> -> vector<2x16xi32>
    %c31_i32_96 = arith.constant 31 : i32
    %253 = vector.broadcast %c31_i32_96 : i32 to vector<2x16xi32>
    %254 = arith.shrsi %252, %253 : vector<2x16xi32>
    %c2147483647_i32_97 = arith.constant 2147483647 : i32
    %255 = vector.broadcast %c2147483647_i32_97 : i32 to vector<2x16xi32>
    %256 = arith.andi %254, %255 : vector<2x16xi32>
    %257 = arith.xori %252, %256 : vector<2x16xi32>
    %c-16_i32_98 = arith.constant -16 : i32
    %258 = vector.broadcast %c-16_i32_98 : i32 to vector<2x16xi32>
    %259 = arith.andi %257, %258 : vector<2x16xi32>
    %c15_i32_99 = arith.constant 15 : i32
    %260 = vector.broadcast %c15_i32_99 : i32 to vector<2x16xi32>
    %261 = arith.subi %260, %29 : vector<2x16xi32>
    %262 = arith.ori %259, %261 : vector<2x16xi32>
    %cst_100 = arith.constant dense<-2147483648> : vector<2xi32>
    %263 = vector.multi_reduction <maxsi>, %262, %cst_100 [1] : vector<2x16xi32> to vector<2xi32>
    %264 = vector.shape_cast %263 : vector<2xi32> to vector<2x1xi32>
    %265 = vector.broadcast %264 : vector<2x1xi32> to vector<2x16xi32>
    %266 = arith.cmpi eq, %262, %265 : vector<2x16xi32>
    %267 = arith.extui %266 : vector<2x16xi1> to vector<2x16xi32>
    %268 = arith.sitofp %267 : vector<2x16xi32> to vector<2x16xf32>
    %269 = arith.truncf %268 : vector<2x16xf32> to vector<2x16xbf16>
    %c15_i32_101 = arith.constant 15 : i32
    %270 = vector.broadcast %c15_i32_101 : i32 to vector<2x1xi32>
    %271 = arith.andi %264, %270 : vector<2x1xi32>
    %c63_i32 = arith.constant 63 : i32
    %272 = vector.broadcast %c63_i32 : i32 to vector<2x1xi32>
    %273 = arith.subi %272, %271 : vector<2x1xi32>
    %274 = vector.broadcast %273 : vector<2x1xi32> to vector<2x128xi32>
    %275 = arith.cmpi eq, %30, %274 : vector<2x128xi32>
    %cst_102 = arith.constant 1.000000e+00 : f32
    %276 = vector.broadcast %cst_102 : f32 to vector<2x128xf32>
    %277 = arith.select %275, %276, %214 : vector<2x128xi1>, vector<2x128xf32>
    %278 = arith.truncf %245 : vector<2x32xf32> to vector<2x32xbf16>
    %cst_103 = arith.constant dense<0.000000e+00> : vector<2x32xf32>
    %279 = tpu.matmul %278, %7, %cst_103 {dimension_numbers = #tpu.dot_dimension_numbers<[1], [0], [0], [1], [0, 0, 1, 1], [], []>} : vector<2x32xbf16>, vector<32x32xbf16>, vector<2x32xf32> -> vector<2x32xf32>
    %cst_104 = arith.constant dense<0.000000e+00> : vector<2x32xf32>
    %280 = tpu.matmul %278, %9, %cst_104 {dimension_numbers = #tpu.dot_dimension_numbers<[1], [0], [0], [1], [0, 0, 1, 1], [], []>} : vector<2x32xbf16>, vector<32x32xbf16>, vector<2x32xf32> -> vector<2x32xf32>
    %cst_105 = arith.constant dense<0.000000e+00> : vector<2x32xf32>
    %281 = tpu.matmul %278, %11, %cst_105 {dimension_numbers = #tpu.dot_dimension_numbers<[1], [0], [0], [1], [0, 0, 1, 1], [], []>} : vector<2x32xbf16>, vector<32x32xbf16>, vector<2x32xf32> -> vector<2x32xf32>
    %cst_106 = arith.constant dense<0.000000e+00> : vector<2x32xf32>
    %282 = tpu.matmul %269, %1, %cst_106 {dimension_numbers = #tpu.dot_dimension_numbers<[1], [0], [0], [1], [0, 0, 1, 1], [], []>} : vector<2x16xbf16>, vector<16x32xbf16>, vector<2x32xf32> -> vector<2x32xf32>
    %283 = arith.addf %282, %279 : vector<2x32xf32>
    %284 = arith.addf %283, %15 : vector<2x32xf32>
    %cst_107 = arith.constant dense<0.000000e+00> : vector<2x32xf32>
    %285 = tpu.matmul %269, %3, %cst_107 {dimension_numbers = #tpu.dot_dimension_numbers<[1], [0], [0], [1], [0, 0, 1, 1], [], []>} : vector<2x16xbf16>, vector<16x32xbf16>, vector<2x32xf32> -> vector<2x32xf32>
    %286 = arith.addf %285, %280 : vector<2x32xf32>
    %287 = arith.addf %286, %18 : vector<2x32xf32>
    %cst_108 = arith.constant dense<0.000000e+00> : vector<2x32xf32>
    %288 = tpu.matmul %269, %5, %cst_108 {dimension_numbers = #tpu.dot_dimension_numbers<[1], [0], [0], [1], [0, 0, 1, 1], [], []>} : vector<2x16xbf16>, vector<16x32xbf16>, vector<2x32xf32> -> vector<2x32xf32>
    %289 = arith.addf %288, %21 : vector<2x32xf32>
    %290 = arith.negf %284 : vector<2x32xf32>
    %291 = math.exp %290 : vector<2x32xf32>
    %cst_109 = arith.constant 1.000000e+00 : f32
    %292 = vector.broadcast %cst_109 : f32 to vector<2x32xf32>
    %293 = arith.addf %292, %291 : vector<2x32xf32>
    %294 = arith.divf %292, %293 : vector<2x32xf32>
    %295 = arith.negf %287 : vector<2x32xf32>
    %296 = math.exp %295 : vector<2x32xf32>
    %cst_110 = arith.constant 1.000000e+00 : f32
    %297 = vector.broadcast %cst_110 : f32 to vector<2x32xf32>
    %298 = arith.addf %297, %296 : vector<2x32xf32>
    %299 = arith.divf %297, %298 : vector<2x32xf32>
    %300 = arith.addf %281, %24 : vector<2x32xf32>
    %301 = arith.mulf %294, %300 : vector<2x32xf32>
    %302 = arith.addf %289, %301 : vector<2x32xf32>
    %303 = math.tanh %302 : vector<2x32xf32>
    %cst_111 = arith.constant 1.000000e+00 : f32
    %304 = vector.broadcast %cst_111 : f32 to vector<2x32xf32>
    %305 = arith.subf %304, %299 : vector<2x32xf32>
    %306 = arith.mulf %305, %303 : vector<2x32xf32>
    %307 = arith.mulf %299, %245 : vector<2x32xf32>
    %308 = arith.addf %306, %307 : vector<2x32xf32>
    %309 = arith.truncf %308 : vector<2x32xf32> to vector<2x32xbf16>
    %cst_112 = arith.constant dense<0.000000e+00> : vector<2x16xf32>
    %310 = tpu.matmul %309, %12, %cst_112 {dimension_numbers = #tpu.dot_dimension_numbers<[1], [0], [0], [1], [0, 0, 1, 1], [], []>} : vector<2x32xbf16>, vector<32x16xbf16>, vector<2x16xf32> -> vector<2x16xf32>
    %311 = arith.addf %310, %27 : vector<2x16xf32>
    %c4 = arith.constant 4 : index
    %c0_113 = arith.constant 0 : index
    %c0_114 = arith.constant 0 : index
    %312 = vector.load %arg2[%c4, %c0_113, %c0_114] : memref<8x2x16xf32, #tpu.memory_space<vmem>>, vector<1x2x16xf32>
    %313 = vector.shape_cast %312 : vector<1x2x16xf32> to vector<2x16xf32>
    %314 = arith.addf %311, %313 : vector<2x16xf32>
    %315 = tpu.bitcast %314 : vector<2x16xf32> -> vector<2x16xi32>
    %c31_i32_115 = arith.constant 31 : i32
    %316 = vector.broadcast %c31_i32_115 : i32 to vector<2x16xi32>
    %317 = arith.shrsi %315, %316 : vector<2x16xi32>
    %c2147483647_i32_116 = arith.constant 2147483647 : i32
    %318 = vector.broadcast %c2147483647_i32_116 : i32 to vector<2x16xi32>
    %319 = arith.andi %317, %318 : vector<2x16xi32>
    %320 = arith.xori %315, %319 : vector<2x16xi32>
    %c-16_i32_117 = arith.constant -16 : i32
    %321 = vector.broadcast %c-16_i32_117 : i32 to vector<2x16xi32>
    %322 = arith.andi %320, %321 : vector<2x16xi32>
    %c15_i32_118 = arith.constant 15 : i32
    %323 = vector.broadcast %c15_i32_118 : i32 to vector<2x16xi32>
    %324 = arith.subi %323, %29 : vector<2x16xi32>
    %325 = arith.ori %322, %324 : vector<2x16xi32>
    %cst_119 = arith.constant dense<-2147483648> : vector<2xi32>
    %326 = vector.multi_reduction <maxsi>, %325, %cst_119 [1] : vector<2x16xi32> to vector<2xi32>
    %327 = vector.shape_cast %326 : vector<2xi32> to vector<2x1xi32>
    %328 = vector.broadcast %327 : vector<2x1xi32> to vector<2x16xi32>
    %329 = arith.cmpi eq, %325, %328 : vector<2x16xi32>
    %330 = arith.extui %329 : vector<2x16xi1> to vector<2x16xi32>
    %331 = arith.sitofp %330 : vector<2x16xi32> to vector<2x16xf32>
    %332 = arith.truncf %331 : vector<2x16xf32> to vector<2x16xbf16>
    %c15_i32_120 = arith.constant 15 : i32
    %333 = vector.broadcast %c15_i32_120 : i32 to vector<2x1xi32>
    %334 = arith.andi %327, %333 : vector<2x1xi32>
    %c79_i32 = arith.constant 79 : i32
    %335 = vector.broadcast %c79_i32 : i32 to vector<2x1xi32>
    %336 = arith.subi %335, %334 : vector<2x1xi32>
    %337 = vector.broadcast %336 : vector<2x1xi32> to vector<2x128xi32>
    %338 = arith.cmpi eq, %30, %337 : vector<2x128xi32>
    %cst_121 = arith.constant 1.000000e+00 : f32
    %339 = vector.broadcast %cst_121 : f32 to vector<2x128xf32>
    %340 = arith.select %338, %339, %277 : vector<2x128xi1>, vector<2x128xf32>
    %341 = arith.truncf %308 : vector<2x32xf32> to vector<2x32xbf16>
    %cst_122 = arith.constant dense<0.000000e+00> : vector<2x32xf32>
    %342 = tpu.matmul %341, %7, %cst_122 {dimension_numbers = #tpu.dot_dimension_numbers<[1], [0], [0], [1], [0, 0, 1, 1], [], []>} : vector<2x32xbf16>, vector<32x32xbf16>, vector<2x32xf32> -> vector<2x32xf32>
    %cst_123 = arith.constant dense<0.000000e+00> : vector<2x32xf32>
    %343 = tpu.matmul %341, %9, %cst_123 {dimension_numbers = #tpu.dot_dimension_numbers<[1], [0], [0], [1], [0, 0, 1, 1], [], []>} : vector<2x32xbf16>, vector<32x32xbf16>, vector<2x32xf32> -> vector<2x32xf32>
    %cst_124 = arith.constant dense<0.000000e+00> : vector<2x32xf32>
    %344 = tpu.matmul %341, %11, %cst_124 {dimension_numbers = #tpu.dot_dimension_numbers<[1], [0], [0], [1], [0, 0, 1, 1], [], []>} : vector<2x32xbf16>, vector<32x32xbf16>, vector<2x32xf32> -> vector<2x32xf32>
    %cst_125 = arith.constant dense<0.000000e+00> : vector<2x32xf32>
    %345 = tpu.matmul %332, %1, %cst_125 {dimension_numbers = #tpu.dot_dimension_numbers<[1], [0], [0], [1], [0, 0, 1, 1], [], []>} : vector<2x16xbf16>, vector<16x32xbf16>, vector<2x32xf32> -> vector<2x32xf32>
    %346 = arith.addf %345, %342 : vector<2x32xf32>
    %347 = arith.addf %346, %15 : vector<2x32xf32>
    %cst_126 = arith.constant dense<0.000000e+00> : vector<2x32xf32>
    %348 = tpu.matmul %332, %3, %cst_126 {dimension_numbers = #tpu.dot_dimension_numbers<[1], [0], [0], [1], [0, 0, 1, 1], [], []>} : vector<2x16xbf16>, vector<16x32xbf16>, vector<2x32xf32> -> vector<2x32xf32>
    %349 = arith.addf %348, %343 : vector<2x32xf32>
    %350 = arith.addf %349, %18 : vector<2x32xf32>
    %cst_127 = arith.constant dense<0.000000e+00> : vector<2x32xf32>
    %351 = tpu.matmul %332, %5, %cst_127 {dimension_numbers = #tpu.dot_dimension_numbers<[1], [0], [0], [1], [0, 0, 1, 1], [], []>} : vector<2x16xbf16>, vector<16x32xbf16>, vector<2x32xf32> -> vector<2x32xf32>
    %352 = arith.addf %351, %21 : vector<2x32xf32>
    %353 = arith.negf %347 : vector<2x32xf32>
    %354 = math.exp %353 : vector<2x32xf32>
    %cst_128 = arith.constant 1.000000e+00 : f32
    %355 = vector.broadcast %cst_128 : f32 to vector<2x32xf32>
    %356 = arith.addf %355, %354 : vector<2x32xf32>
    %357 = arith.divf %355, %356 : vector<2x32xf32>
    %358 = arith.negf %350 : vector<2x32xf32>
    %359 = math.exp %358 : vector<2x32xf32>
    %cst_129 = arith.constant 1.000000e+00 : f32
    %360 = vector.broadcast %cst_129 : f32 to vector<2x32xf32>
    %361 = arith.addf %360, %359 : vector<2x32xf32>
    %362 = arith.divf %360, %361 : vector<2x32xf32>
    %363 = arith.addf %344, %24 : vector<2x32xf32>
    %364 = arith.mulf %357, %363 : vector<2x32xf32>
    %365 = arith.addf %352, %364 : vector<2x32xf32>
    %366 = math.tanh %365 : vector<2x32xf32>
    %cst_130 = arith.constant 1.000000e+00 : f32
    %367 = vector.broadcast %cst_130 : f32 to vector<2x32xf32>
    %368 = arith.subf %367, %362 : vector<2x32xf32>
    %369 = arith.mulf %368, %366 : vector<2x32xf32>
    %370 = arith.mulf %362, %308 : vector<2x32xf32>
    %371 = arith.addf %369, %370 : vector<2x32xf32>
    %372 = arith.truncf %371 : vector<2x32xf32> to vector<2x32xbf16>
    %cst_131 = arith.constant dense<0.000000e+00> : vector<2x16xf32>
    %373 = tpu.matmul %372, %12, %cst_131 {dimension_numbers = #tpu.dot_dimension_numbers<[1], [0], [0], [1], [0, 0, 1, 1], [], []>} : vector<2x32xbf16>, vector<32x16xbf16>, vector<2x16xf32> -> vector<2x16xf32>
    %374 = arith.addf %373, %27 : vector<2x16xf32>
    %c5 = arith.constant 5 : index
    %c0_132 = arith.constant 0 : index
    %c0_133 = arith.constant 0 : index
    %375 = vector.load %arg2[%c5, %c0_132, %c0_133] : memref<8x2x16xf32, #tpu.memory_space<vmem>>, vector<1x2x16xf32>
    %376 = vector.shape_cast %375 : vector<1x2x16xf32> to vector<2x16xf32>
    %377 = arith.addf %374, %376 : vector<2x16xf32>
    %378 = tpu.bitcast %377 : vector<2x16xf32> -> vector<2x16xi32>
    %c31_i32_134 = arith.constant 31 : i32
    %379 = vector.broadcast %c31_i32_134 : i32 to vector<2x16xi32>
    %380 = arith.shrsi %378, %379 : vector<2x16xi32>
    %c2147483647_i32_135 = arith.constant 2147483647 : i32
    %381 = vector.broadcast %c2147483647_i32_135 : i32 to vector<2x16xi32>
    %382 = arith.andi %380, %381 : vector<2x16xi32>
    %383 = arith.xori %378, %382 : vector<2x16xi32>
    %c-16_i32_136 = arith.constant -16 : i32
    %384 = vector.broadcast %c-16_i32_136 : i32 to vector<2x16xi32>
    %385 = arith.andi %383, %384 : vector<2x16xi32>
    %c15_i32_137 = arith.constant 15 : i32
    %386 = vector.broadcast %c15_i32_137 : i32 to vector<2x16xi32>
    %387 = arith.subi %386, %29 : vector<2x16xi32>
    %388 = arith.ori %385, %387 : vector<2x16xi32>
    %cst_138 = arith.constant dense<-2147483648> : vector<2xi32>
    %389 = vector.multi_reduction <maxsi>, %388, %cst_138 [1] : vector<2x16xi32> to vector<2xi32>
    %390 = vector.shape_cast %389 : vector<2xi32> to vector<2x1xi32>
    %391 = vector.broadcast %390 : vector<2x1xi32> to vector<2x16xi32>
    %392 = arith.cmpi eq, %388, %391 : vector<2x16xi32>
    %393 = arith.extui %392 : vector<2x16xi1> to vector<2x16xi32>
    %394 = arith.sitofp %393 : vector<2x16xi32> to vector<2x16xf32>
    %395 = arith.truncf %394 : vector<2x16xf32> to vector<2x16xbf16>
    %c15_i32_139 = arith.constant 15 : i32
    %396 = vector.broadcast %c15_i32_139 : i32 to vector<2x1xi32>
    %397 = arith.andi %390, %396 : vector<2x1xi32>
    %c95_i32 = arith.constant 95 : i32
    %398 = vector.broadcast %c95_i32 : i32 to vector<2x1xi32>
    %399 = arith.subi %398, %397 : vector<2x1xi32>
    %400 = vector.broadcast %399 : vector<2x1xi32> to vector<2x128xi32>
    %401 = arith.cmpi eq, %30, %400 : vector<2x128xi32>
    %cst_140 = arith.constant 1.000000e+00 : f32
    %402 = vector.broadcast %cst_140 : f32 to vector<2x128xf32>
    %403 = arith.select %401, %402, %340 : vector<2x128xi1>, vector<2x128xf32>
    %404 = arith.truncf %371 : vector<2x32xf32> to vector<2x32xbf16>
    %cst_141 = arith.constant dense<0.000000e+00> : vector<2x32xf32>
    %405 = tpu.matmul %404, %7, %cst_141 {dimension_numbers = #tpu.dot_dimension_numbers<[1], [0], [0], [1], [0, 0, 1, 1], [], []>} : vector<2x32xbf16>, vector<32x32xbf16>, vector<2x32xf32> -> vector<2x32xf32>
    %cst_142 = arith.constant dense<0.000000e+00> : vector<2x32xf32>
    %406 = tpu.matmul %404, %9, %cst_142 {dimension_numbers = #tpu.dot_dimension_numbers<[1], [0], [0], [1], [0, 0, 1, 1], [], []>} : vector<2x32xbf16>, vector<32x32xbf16>, vector<2x32xf32> -> vector<2x32xf32>
    %cst_143 = arith.constant dense<0.000000e+00> : vector<2x32xf32>
    %407 = tpu.matmul %404, %11, %cst_143 {dimension_numbers = #tpu.dot_dimension_numbers<[1], [0], [0], [1], [0, 0, 1, 1], [], []>} : vector<2x32xbf16>, vector<32x32xbf16>, vector<2x32xf32> -> vector<2x32xf32>
    %cst_144 = arith.constant dense<0.000000e+00> : vector<2x32xf32>
    %408 = tpu.matmul %395, %1, %cst_144 {dimension_numbers = #tpu.dot_dimension_numbers<[1], [0], [0], [1], [0, 0, 1, 1], [], []>} : vector<2x16xbf16>, vector<16x32xbf16>, vector<2x32xf32> -> vector<2x32xf32>
    %409 = arith.addf %408, %405 : vector<2x32xf32>
    %410 = arith.addf %409, %15 : vector<2x32xf32>
    %cst_145 = arith.constant dense<0.000000e+00> : vector<2x32xf32>
    %411 = tpu.matmul %395, %3, %cst_145 {dimension_numbers = #tpu.dot_dimension_numbers<[1], [0], [0], [1], [0, 0, 1, 1], [], []>} : vector<2x16xbf16>, vector<16x32xbf16>, vector<2x32xf32> -> vector<2x32xf32>
    %412 = arith.addf %411, %406 : vector<2x32xf32>
    %413 = arith.addf %412, %18 : vector<2x32xf32>
    %cst_146 = arith.constant dense<0.000000e+00> : vector<2x32xf32>
    %414 = tpu.matmul %395, %5, %cst_146 {dimension_numbers = #tpu.dot_dimension_numbers<[1], [0], [0], [1], [0, 0, 1, 1], [], []>} : vector<2x16xbf16>, vector<16x32xbf16>, vector<2x32xf32> -> vector<2x32xf32>
    %415 = arith.addf %414, %21 : vector<2x32xf32>
    %416 = arith.negf %410 : vector<2x32xf32>
    %417 = math.exp %416 : vector<2x32xf32>
    %cst_147 = arith.constant 1.000000e+00 : f32
    %418 = vector.broadcast %cst_147 : f32 to vector<2x32xf32>
    %419 = arith.addf %418, %417 : vector<2x32xf32>
    %420 = arith.divf %418, %419 : vector<2x32xf32>
    %421 = arith.negf %413 : vector<2x32xf32>
    %422 = math.exp %421 : vector<2x32xf32>
    %cst_148 = arith.constant 1.000000e+00 : f32
    %423 = vector.broadcast %cst_148 : f32 to vector<2x32xf32>
    %424 = arith.addf %423, %422 : vector<2x32xf32>
    %425 = arith.divf %423, %424 : vector<2x32xf32>
    %426 = arith.addf %407, %24 : vector<2x32xf32>
    %427 = arith.mulf %420, %426 : vector<2x32xf32>
    %428 = arith.addf %415, %427 : vector<2x32xf32>
    %429 = math.tanh %428 : vector<2x32xf32>
    %cst_149 = arith.constant 1.000000e+00 : f32
    %430 = vector.broadcast %cst_149 : f32 to vector<2x32xf32>
    %431 = arith.subf %430, %425 : vector<2x32xf32>
    %432 = arith.mulf %431, %429 : vector<2x32xf32>
    %433 = arith.mulf %425, %371 : vector<2x32xf32>
    %434 = arith.addf %432, %433 : vector<2x32xf32>
    %435 = arith.truncf %434 : vector<2x32xf32> to vector<2x32xbf16>
    %cst_150 = arith.constant dense<0.000000e+00> : vector<2x16xf32>
    %436 = tpu.matmul %435, %12, %cst_150 {dimension_numbers = #tpu.dot_dimension_numbers<[1], [0], [0], [1], [0, 0, 1, 1], [], []>} : vector<2x32xbf16>, vector<32x16xbf16>, vector<2x16xf32> -> vector<2x16xf32>
    %437 = arith.addf %436, %27 : vector<2x16xf32>
    %c6 = arith.constant 6 : index
    %c0_151 = arith.constant 0 : index
    %c0_152 = arith.constant 0 : index
    %438 = vector.load %arg2[%c6, %c0_151, %c0_152] : memref<8x2x16xf32, #tpu.memory_space<vmem>>, vector<1x2x16xf32>
    %439 = vector.shape_cast %438 : vector<1x2x16xf32> to vector<2x16xf32>
    %440 = arith.addf %437, %439 : vector<2x16xf32>
    %441 = tpu.bitcast %440 : vector<2x16xf32> -> vector<2x16xi32>
    %c31_i32_153 = arith.constant 31 : i32
    %442 = vector.broadcast %c31_i32_153 : i32 to vector<2x16xi32>
    %443 = arith.shrsi %441, %442 : vector<2x16xi32>
    %c2147483647_i32_154 = arith.constant 2147483647 : i32
    %444 = vector.broadcast %c2147483647_i32_154 : i32 to vector<2x16xi32>
    %445 = arith.andi %443, %444 : vector<2x16xi32>
    %446 = arith.xori %441, %445 : vector<2x16xi32>
    %c-16_i32_155 = arith.constant -16 : i32
    %447 = vector.broadcast %c-16_i32_155 : i32 to vector<2x16xi32>
    %448 = arith.andi %446, %447 : vector<2x16xi32>
    %c15_i32_156 = arith.constant 15 : i32
    %449 = vector.broadcast %c15_i32_156 : i32 to vector<2x16xi32>
    %450 = arith.subi %449, %29 : vector<2x16xi32>
    %451 = arith.ori %448, %450 : vector<2x16xi32>
    %cst_157 = arith.constant dense<-2147483648> : vector<2xi32>
    %452 = vector.multi_reduction <maxsi>, %451, %cst_157 [1] : vector<2x16xi32> to vector<2xi32>
    %453 = vector.shape_cast %452 : vector<2xi32> to vector<2x1xi32>
    %454 = vector.broadcast %453 : vector<2x1xi32> to vector<2x16xi32>
    %455 = arith.cmpi eq, %451, %454 : vector<2x16xi32>
    %456 = arith.extui %455 : vector<2x16xi1> to vector<2x16xi32>
    %457 = arith.sitofp %456 : vector<2x16xi32> to vector<2x16xf32>
    %458 = arith.truncf %457 : vector<2x16xf32> to vector<2x16xbf16>
    %c15_i32_158 = arith.constant 15 : i32
    %459 = vector.broadcast %c15_i32_158 : i32 to vector<2x1xi32>
    %460 = arith.andi %453, %459 : vector<2x1xi32>
    %c111_i32 = arith.constant 111 : i32
    %461 = vector.broadcast %c111_i32 : i32 to vector<2x1xi32>
    %462 = arith.subi %461, %460 : vector<2x1xi32>
    %463 = vector.broadcast %462 : vector<2x1xi32> to vector<2x128xi32>
    %464 = arith.cmpi eq, %30, %463 : vector<2x128xi32>
    %cst_159 = arith.constant 1.000000e+00 : f32
    %465 = vector.broadcast %cst_159 : f32 to vector<2x128xf32>
    %466 = arith.select %464, %465, %403 : vector<2x128xi1>, vector<2x128xf32>
    %467 = arith.truncf %434 : vector<2x32xf32> to vector<2x32xbf16>
    %cst_160 = arith.constant dense<0.000000e+00> : vector<2x32xf32>
    %468 = tpu.matmul %467, %7, %cst_160 {dimension_numbers = #tpu.dot_dimension_numbers<[1], [0], [0], [1], [0, 0, 1, 1], [], []>} : vector<2x32xbf16>, vector<32x32xbf16>, vector<2x32xf32> -> vector<2x32xf32>
    %cst_161 = arith.constant dense<0.000000e+00> : vector<2x32xf32>
    %469 = tpu.matmul %467, %9, %cst_161 {dimension_numbers = #tpu.dot_dimension_numbers<[1], [0], [0], [1], [0, 0, 1, 1], [], []>} : vector<2x32xbf16>, vector<32x32xbf16>, vector<2x32xf32> -> vector<2x32xf32>
    %cst_162 = arith.constant dense<0.000000e+00> : vector<2x32xf32>
    %470 = tpu.matmul %467, %11, %cst_162 {dimension_numbers = #tpu.dot_dimension_numbers<[1], [0], [0], [1], [0, 0, 1, 1], [], []>} : vector<2x32xbf16>, vector<32x32xbf16>, vector<2x32xf32> -> vector<2x32xf32>
    %cst_163 = arith.constant dense<0.000000e+00> : vector<2x32xf32>
    %471 = tpu.matmul %458, %1, %cst_163 {dimension_numbers = #tpu.dot_dimension_numbers<[1], [0], [0], [1], [0, 0, 1, 1], [], []>} : vector<2x16xbf16>, vector<16x32xbf16>, vector<2x32xf32> -> vector<2x32xf32>
    %472 = arith.addf %471, %468 : vector<2x32xf32>
    %473 = arith.addf %472, %15 : vector<2x32xf32>
    %cst_164 = arith.constant dense<0.000000e+00> : vector<2x32xf32>
    %474 = tpu.matmul %458, %3, %cst_164 {dimension_numbers = #tpu.dot_dimension_numbers<[1], [0], [0], [1], [0, 0, 1, 1], [], []>} : vector<2x16xbf16>, vector<16x32xbf16>, vector<2x32xf32> -> vector<2x32xf32>
    %475 = arith.addf %474, %469 : vector<2x32xf32>
    %476 = arith.addf %475, %18 : vector<2x32xf32>
    %cst_165 = arith.constant dense<0.000000e+00> : vector<2x32xf32>
    %477 = tpu.matmul %458, %5, %cst_165 {dimension_numbers = #tpu.dot_dimension_numbers<[1], [0], [0], [1], [0, 0, 1, 1], [], []>} : vector<2x16xbf16>, vector<16x32xbf16>, vector<2x32xf32> -> vector<2x32xf32>
    %478 = arith.addf %477, %21 : vector<2x32xf32>
    %479 = arith.negf %473 : vector<2x32xf32>
    %480 = math.exp %479 : vector<2x32xf32>
    %cst_166 = arith.constant 1.000000e+00 : f32
    %481 = vector.broadcast %cst_166 : f32 to vector<2x32xf32>
    %482 = arith.addf %481, %480 : vector<2x32xf32>
    %483 = arith.divf %481, %482 : vector<2x32xf32>
    %484 = arith.negf %476 : vector<2x32xf32>
    %485 = math.exp %484 : vector<2x32xf32>
    %cst_167 = arith.constant 1.000000e+00 : f32
    %486 = vector.broadcast %cst_167 : f32 to vector<2x32xf32>
    %487 = arith.addf %486, %485 : vector<2x32xf32>
    %488 = arith.divf %486, %487 : vector<2x32xf32>
    %489 = arith.addf %470, %24 : vector<2x32xf32>
    %490 = arith.mulf %483, %489 : vector<2x32xf32>
    %491 = arith.addf %478, %490 : vector<2x32xf32>
    %492 = math.tanh %491 : vector<2x32xf32>
    %cst_168 = arith.constant 1.000000e+00 : f32
    %493 = vector.broadcast %cst_168 : f32 to vector<2x32xf32>
    %494 = arith.subf %493, %488 : vector<2x32xf32>
    %495 = arith.mulf %494, %492 : vector<2x32xf32>
    %496 = arith.mulf %488, %434 : vector<2x32xf32>
    %497 = arith.addf %495, %496 : vector<2x32xf32>
    %498 = arith.truncf %497 : vector<2x32xf32> to vector<2x32xbf16>
    %cst_169 = arith.constant dense<0.000000e+00> : vector<2x16xf32>
    %499 = tpu.matmul %498, %12, %cst_169 {dimension_numbers = #tpu.dot_dimension_numbers<[1], [0], [0], [1], [0, 0, 1, 1], [], []>} : vector<2x32xbf16>, vector<32x16xbf16>, vector<2x16xf32> -> vector<2x16xf32>
    %500 = arith.addf %499, %27 : vector<2x16xf32>
    %c7 = arith.constant 7 : index
    %c0_170 = arith.constant 0 : index
    %c0_171 = arith.constant 0 : index
    %501 = vector.load %arg2[%c7, %c0_170, %c0_171] : memref<8x2x16xf32, #tpu.memory_space<vmem>>, vector<1x2x16xf32>
    %502 = vector.shape_cast %501 : vector<1x2x16xf32> to vector<2x16xf32>
    %503 = arith.addf %500, %502 : vector<2x16xf32>
    %504 = tpu.bitcast %503 : vector<2x16xf32> -> vector<2x16xi32>
    %c31_i32_172 = arith.constant 31 : i32
    %505 = vector.broadcast %c31_i32_172 : i32 to vector<2x16xi32>
    %506 = arith.shrsi %504, %505 : vector<2x16xi32>
    %c2147483647_i32_173 = arith.constant 2147483647 : i32
    %507 = vector.broadcast %c2147483647_i32_173 : i32 to vector<2x16xi32>
    %508 = arith.andi %506, %507 : vector<2x16xi32>
    %509 = arith.xori %504, %508 : vector<2x16xi32>
    %c-16_i32_174 = arith.constant -16 : i32
    %510 = vector.broadcast %c-16_i32_174 : i32 to vector<2x16xi32>
    %511 = arith.andi %509, %510 : vector<2x16xi32>
    %c15_i32_175 = arith.constant 15 : i32
    %512 = vector.broadcast %c15_i32_175 : i32 to vector<2x16xi32>
    %513 = arith.subi %512, %29 : vector<2x16xi32>
    %514 = arith.ori %511, %513 : vector<2x16xi32>
    %cst_176 = arith.constant dense<-2147483648> : vector<2xi32>
    %515 = vector.multi_reduction <maxsi>, %514, %cst_176 [1] : vector<2x16xi32> to vector<2xi32>
    %516 = vector.shape_cast %515 : vector<2xi32> to vector<2x1xi32>
    %c15_i32_177 = arith.constant 15 : i32
    %517 = vector.broadcast %c15_i32_177 : i32 to vector<2x1xi32>
    %518 = arith.andi %516, %517 : vector<2x1xi32>
    %c127_i32 = arith.constant 127 : i32
    %519 = vector.broadcast %c127_i32 : i32 to vector<2x1xi32>
    %520 = arith.subi %519, %518 : vector<2x1xi32>
    %521 = vector.broadcast %520 : vector<2x1xi32> to vector<2x128xi32>
    %522 = arith.cmpi eq, %30, %521 : vector<2x128xi32>
    %cst_178 = arith.constant 1.000000e+00 : f32
    %523 = vector.broadcast %cst_178 : f32 to vector<2x128xf32>
    %524 = arith.select %522, %523, %466 : vector<2x128xi1>, vector<2x128xf32>
    %c0_179 = arith.constant 0 : index
    %c0_180 = arith.constant 0 : index
    %525 = vector.load %arg8[%c0_179, %c0_180] : memref<2x128xf32, #tpu.memory_space<vmem>>, vector<2x128xf32>
    tpu.vector_store %arg8[%c0_179, %c0_180], %524 {strides = array<i32>} : memref<2x128xf32, #tpu.memory_space<vmem>>, vector<2x128xf32>,
    return
  }
  func.func @transform_0(%arg0: i32) -> (i32, i32) {
    %c0_i32 = arith.constant 0 : i32
    %c0_i32_0 = arith.constant 0 : i32
    return %arg0, %c0_i32 : i32, i32
  }
  func.func @transform_1(%arg0: i32) -> (i32, i32, i32) {
    %c0_i32 = arith.constant 0 : i32
    %c0_i32_0 = arith.constant 0 : i32
    %c0_i32_1 = arith.constant 0 : i32
    return %c0_i32, %arg0, %c0_i32_0 : i32, i32, i32
  }
  func.func @transform_2(%arg0: i32) -> (i32, i32, i32) {
    %c0_i32 = arith.constant 0 : i32
    %c0_i32_0 = arith.constant 0 : i32
    %c0_i32_1 = arith.constant 0 : i32
    %c0_i32_2 = arith.constant 0 : i32
    return %c0_i32, %c0_i32_0, %c0_i32_1 : i32, i32, i32
  }
  func.func @transform_3(%arg0: i32) -> (i32, i32, i32) {
    %c0_i32 = arith.constant 0 : i32
    %c0_i32_0 = arith.constant 0 : i32
    %c0_i32_1 = arith.constant 0 : i32
    %c0_i32_2 = arith.constant 0 : i32
    return %c0_i32, %c0_i32_0, %c0_i32_1 : i32, i32, i32
  }
  func.func @transform_4(%arg0: i32) -> (i32, i32) {
    %c0_i32 = arith.constant 0 : i32
    %c0_i32_0 = arith.constant 0 : i32
    %c0_i32_1 = arith.constant 0 : i32
    return %c0_i32, %c0_i32_0 : i32, i32
  }
  func.func @transform_5(%arg0: i32) -> (i32, i32) {
    %c0_i32 = arith.constant 0 : i32
    %c0_i32_0 = arith.constant 0 : i32
    %c0_i32_1 = arith.constant 0 : i32
    return %c0_i32, %c0_i32_0 : i32, i32
  }
  func.func @transform_6(%arg0: i32) -> (i32, i32) {
    %c0_i32 = arith.constant 0 : i32
    %c0_i32_0 = arith.constant 0 : i32
    %c0_i32_1 = arith.constant 0 : i32
    return %c0_i32, %c0_i32_0 : i32, i32
  }
  func.func @transform_7(%arg0: i32) -> (i32, i32) {
    %c0_i32 = arith.constant 0 : i32
    %c0_i32_0 = arith.constant 0 : i32
    return %arg0, %c0_i32 : i32, i32
  }
}

</mosaic_0001>

<llo_original>
// kernel: tpu_custom_call.1
$region0: #{tpu_custom_call.1}
  #allocation0 [shape = 'u32[]', space=smem, size = 0x4, offset = 0x4, fixed_abs, tag = 'smem constant byte address 0x4 - core index']
  #allocation1 [shape = 'u32[72,128]{1,0:T(1,128)}', space=vmem, size = 0x9000, scoped, tag = 'internal scratch']
  %s0 = inlined_call_operand.hbm [shape: f32[2,32], index: 0, kind: input, shape index: {}]
  %s1 = inlined_call_operand.hbm [shape: f32[8,2,16], index: 1, kind: input, shape index: {}]
  %s2 = inlined_call_operand.vmem [shape: bf16[3,16,32], index: 2, kind: input, shape index: {}]
  %s3 = inlined_call_operand.hbm [shape: bf16[3,32,32], index: 3, kind: input, shape index: {}]
  %s4 = inlined_call_operand.vmem [shape: bf16[32,16], index: 4, kind: input, shape index: {}]
  %s5 = inlined_call_operand.vmem [shape: f32[4,32], index: 5, kind: input, shape index: {}]
  %s6 = inlined_call_operand.vmem [shape: f32[1,16], index: 6, kind: input, shape index: {}]
  %s7 = inlined_call_operand.hbm [shape: f32[2,128], index: 7, kind: output, shape index: {}]
  %s8 = sld [smem:[#allocation0]]
  $region50: #{tpu_custom_call.1} parent=0
    _
  %s10 = ssub.s32 1, %s8
  %s11 = scalar_select 0, %s10, %s8
  $region1: #{tpu_custom_call.1} parent=0
    #allocation2 [shape = 'u8[1024]{0}', space=vmem, size = 0x400, scoped, tag = 'input window, operand 0, single buffered']
    #allocation3 [shape = 's32[1]{0}', space=sflag, size = 0x4, scoped, tag = 'scoped memory for tpu_custom_call.1']
    #allocation4 [shape = 's32[1]{0}', space=sflag, size = 0x4, scoped, tag = 'scoped memory for tpu_custom_call.1']
    #allocation5 [shape = 'u8[8192]{0}', space=vmem, size = 0x2000, scoped, tag = 'input window, operand 1, single buffered']
    #allocation6 [shape = 's32[1]{0}', space=sflag, size = 0x4, scoped, tag = 'scoped memory for tpu_custom_call.1']
    #allocation7 [shape = 'u8[24576]{0}', space=vmem, size = 0x6000, scoped, tag = 'input window, operand 3, single buffered']
    #allocation8 [shape = 'u8[1024]{0}', space=vmem, size = 0x400, scoped, tag = 'output window, operand 0, single buffered']
    %12 = vsyncpa [#allocation3], 0
    %13 = vsyncpa [#allocation6], 0
    %14 = vsyncpa [#allocation4], 0
    // Predicated region
    $region2: #{tpu_custom_call.1} parent=1 // pred_check
      _
    $region3: #{tpu_custom_call.1} parent=1 // pred_check_branch
      %16 = sbr.rel (0) target = $region5
    $region4: #{tpu_custom_call.1} parent=1 // pred_region
      %18 = vsyncadd [#allocation3], 0
      %s20 = sshll.u32 %s0, 4
      %s21 = int_to_ptr.hbm [resolvable:$true] %s20
      %s22 = sshll.u32 [#allocation2], 4
      %s23 = int_to_ptr.vmem [resolvable:$true] %s22
      %25 = dma.hbm_to_vmem [thread:$0]  %s21, 32, %s23, [#allocation3]
    $region5: #{tpu_custom_call.1} parent=1 // pred_fallthru
      _
    // Predicated region
    $region6: #{tpu_custom_call.1} parent=1 // pred_check
      _
    $region7: #{tpu_custom_call.1} parent=1 // pred_check_branch
      %27 = sbr.rel (0) target = $region9
    $region8: #{tpu_custom_call.1} parent=1 // pred_region
      %29 = vsyncadd [#allocation6], 0
      %s30 = sshll.u32 %s1, 4
      %s31 = int_to_ptr.hbm [resolvable:$true] %s30
      %s32 = sshll.u32 [#allocation5], 4
      %s33 = int_to_ptr.vmem [resolvable:$true] %s32
      %38 = dma.hbm_to_vmem [thread:$0]  %s31, 256, %s33, [#allocation6], 32, 32, 2
    $region9: #{tpu_custom_call.1} parent=1 // pred_fallthru
      _
    // Predicated region
    $region10: #{tpu_custom_call.1} parent=1 // pred_check
      _
    $region11: #{tpu_custom_call.1} parent=1 // pred_check_branch
      %40 = sbr.rel (0) target = $region13
    $region12: #{tpu_custom_call.1} parent=1 // pred_region
      _
    $region13: #{tpu_custom_call.1} parent=1 // pred_fallthru
      _
    // Predicated region
    $region14: #{tpu_custom_call.1} parent=1 // pred_check
      _
    $region15: #{tpu_custom_call.1} parent=1 // pred_check_branch
      %42 = sbr.rel (0) target = $region17
    $region16: #{tpu_custom_call.1} parent=1 // pred_region
      %44 = vsyncadd [#allocation6], 0
      %s45 = sshll.u32 %s3, 4
      %s46 = int_to_ptr.hbm [resolvable:$true] %s45
      %s47 = sshll.u32 [#allocation7], 4
      %s48 = int_to_ptr.vmem [resolvable:$true] %s47
      %53 = dma.hbm_to_vmem [thread:$0]  %s46, 768, %s48, [#allocation6], 64, 64, 4
    $region17: #{tpu_custom_call.1} parent=1 // pred_fallthru
      _
    // Predicated region
    $region18: #{tpu_custom_call.1} parent=1 // pred_check
      _
    $region19: #{tpu_custom_call.1} parent=1 // pred_check_branch
      %55 = sbr.rel (0) target = $region21
    $region20: #{tpu_custom_call.1} parent=1 // pred_region
      _
    $region21: #{tpu_custom_call.1} parent=1 // pred_fallthru
      _
    // Predicated region
    $region22: #{tpu_custom_call.1} parent=1 // pred_check
      _
    $region23: #{tpu_custom_call.1} parent=1 // pred_check_branch
      %57 = sbr.rel (0) target = $region25
    $region24: #{tpu_custom_call.1} parent=1 // pred_region
      _
    $region25: #{tpu_custom_call.1} parent=1 // pred_fallthru
      _
    // Predicated region
    $region26: #{tpu_custom_call.1} parent=1 // pred_check
      _
    $region27: #{tpu_custom_call.1} parent=1 // pred_check_branch
      %59 = sbr.rel (0) target = $region29
    $region28: #{tpu_custom_call.1} parent=1 // pred_region
      _
    $region29: #{tpu_custom_call.1} parent=1 // pred_fallthru
      _
    // Predicated region
    $region30: #{tpu_custom_call.1} parent=1 // pred_check
      _
    $region31: #{tpu_custom_call.1} parent=1 // pred_check_branch
      %61 = sbr.rel (0) target = $region33
    $region32: #{tpu_custom_call.1} parent=1 // pred_region
      %63 = dma.done [#allocation3], 32
    $region33: #{tpu_custom_call.1} parent=1 // pred_fallthru
      _
    // Predicated region
    $region34: #{tpu_custom_call.1} parent=1 // pred_check
      _
    $region35: #{tpu_custom_call.1} parent=1 // pred_check_branch
      %65 = sbr.rel (0) target = $region37
    $region36: #{tpu_custom_call.1} parent=1 // pred_region
      %67 = dma.done [#allocation6], 256
    $region37: #{tpu_custom_call.1} parent=1 // pred_fallthru
      _
    // Predicated region
    $region38: #{tpu_custom_call.1} parent=1 // pred_check
      _
    $region39: #{tpu_custom_call.1} parent=1 // pred_check_branch
      %69 = sbr.rel (0) target = $region41
    $region40: #{tpu_custom_call.1} parent=1 // pred_region
      %71 = dma.done [#allocation6], 768
    $region41: #{tpu_custom_call.1} parent=1 // pred_fallthru
      _
    %v73 = vld [vmem:[%s2] sm:$0xf]
    %v74 = vld [vmem:[%s2 + $0x4] sm:$0xf]
    %s75 = scalar_lea.vmem %s2, 8
    %v76 = vld [vmem:[%s75] sm:$0xf]
    %v77 = vld [vmem:[%s75 + $0x4] sm:$0xf]
    %s78 = scalar_lea.vmem %s2, 16
    %v79 = vld [vmem:[%s78] sm:$0xf]
    %v80 = vld [vmem:[%s78 + $0x4] sm:$0xf]
    %v81 = vld [vmem:[#allocation7] sm:$0xf]
    %v82 = vld [vmem:[#allocation7 + $0x4] sm:$0xf]
    %v83 = vld [vmem:[#allocation7 + $0x8] sm:$0xf]
    %v84 = vld [vmem:[#allocation7 + $0xc] sm:$0xf]
    %s85 = scalar_lea.vmem [#allocation7], 16
    %v86 = vld [vmem:[%s85] sm:$0xf]
    %v87 = vld [vmem:[%s85 + $0x4] sm:$0xf]
    %v88 = vld [vmem:[%s85 + $0x8] sm:$0xf]
    %v89 = vld [vmem:[%s85 + $0xc] sm:$0xf]
    %s90 = scalar_lea.vmem [#allocation7], 32
    %v91 = vld [vmem:[%s90] sm:$0xf]
    %v92 = vld [vmem:[%s90 + $0x4] sm:$0xf]
    %v93 = vld [vmem:[%s90 + $0x8] sm:$0xf]
    %v94 = vld [vmem:[%s90 + $0xc] sm:$0xf]
    %v95 = vld [vmem:[%s4] sm:$0xf]
    %v96 = vld [vmem:[%s4 + $0x4] sm:$0xf]
    %v97 = vld [vmem:[%s4 + $0x8] sm:$0xf]
    %v98 = vld [vmem:[%s4 + $0xc] sm:$0xf]
    %v99 = vld [vmem:[%s5] sm:$0x1]
    %v100 = vperm.slane %v99, 0
    %v101 = vld [vmem:[%s5 + $0x1] sm:$0x1]
    %v102 = vperm.slane %v101, 0
    %v103 = vld [vmem:[%s5 + $0x2] sm:$0x1]
    %v104 = vperm.slane %v103, 0
    %v105 = vld [vmem:[%s5 + $0x3] sm:$0x1]
    %v106 = vperm.slane %v105, 0
    %v107 = vld [vmem:[%s6] sm:$0x1]
    %v109 = vperm.slane %v107, 0
    %v111 = vld [vmem:[#allocation2] sm:$0x3]
    %v112 = vlaneseq
    %v113 = vand.u32 %v112, 127
    %v114 = vpack.c.bf16 %v111, %v111
    %v119 = vunpack.c.l.b16 %v81
    %v120 = vunpack.c.l.b16 %v82
    %v121 = vunpack.c.l.b16 %v83
    %v122 = vunpack.c.l.b16 %v84
    %v123 = vpack.c.b16 %v120, %v119
    %v124 = vpack.c.b16 %v122, %v121
    %vm127 = vcmask 261120
    %v129 = vsel %vm127, %v114, 0
    %131 = vmatpush.bf16.msra.mxu0 0
    %132 = vmatpush.bf16.msra.mxu0 0
    %133 = vmatpush.bf16.msra.mxu0 0
    %134 = vmatpush.bf16.msra.mxu0 0
    %135 = vmatpush.bf16.msra.mxu0 0
    %136 = vmatpush.bf16.msra.mxu0 0
    %137 = vmatpush.bf16.msra.mxu0 %v124
    %138 = vmatpush.bf16.msra.mxu0 %v123
    %139 = vmatmul.bf16.gmra.mxu0 %v129
    %v140 = vpop.f32.mrf.mxu0
    %v141 = vadd.f32 %v100, %v140
    %v142 = vpop.f32.mrf.mxu0
    %143 = vdwg.mxu0
    %v148 = vunpack.c.l.b16 %v86
    %v149 = vunpack.c.l.b16 %v87
    %v150 = vunpack.c.l.b16 %v88
    %v151 = vunpack.c.l.b16 %v89
    %v152 = vpack.c.b16 %v149, %v148
    %v153 = vpack.c.b16 %v151, %v150
    %156 = vmatpush.bf16.msra.mxu0 0
    %157 = vmatpush.bf16.msra.mxu0 0
    %158 = vmatpush.bf16.msra.mxu0 0
    %159 = vmatpush.bf16.msra.mxu0 0
    %160 = vmatpush.bf16.msra.mxu0 0
    %161 = vmatpush.bf16.msra.mxu0 0
    %162 = vmatpush.bf16.msra.mxu0 %v153
    %163 = vmatpush.bf16.msra.mxu0 %v152
    %164 = vmatmul.bf16.gmra.mxu0 %v129
    %v165 = vpop.f32.mrf.mxu0
    %v166 = vadd.f32 %v102, %v165
    %v167 = vpop.f32.mrf.mxu0
    %168 = vdwg.mxu0
    %v169 = vxor.u32 %v141, 2147483648
    %v170 = vmul.f32 %v169, 1.442695
    %v171 = vpow.pop %v170
    %v172 = vadd.f32 %v171, 1.0
    %v173 = vrcp.pop %v172
    %v174 = vmul.f32 %v172, %v173
    %v175 = vsub.f32 1.0, %v174
    %v176 = vmul.f32 %v173, %v175
    %v177 = vadd.f32 %v173, %v176
    %vm178 = vweird.f32 %v172
    %vm179 = vweird.f32 %v173
    %vm180 = vmor %vm178, %vm179
    %v181 = vsel %vm180, %v173, %v177
    %v182 = vand.u32 2147483647, %v172
    %vm183 = vcmp.eq.f32.partialorder %v182, 8.507059e+37
    %v184 = vand.u32 %v172, 2147483648
    %v185 = vor.u32 1.1754944e-38, %v184
    %v186 = vsel %vm183, %v185, %v181
    %v187 = vmul.f32 1.0, %v186
    %v188 = vxor.u32 %v166, 2147483648
    %v189 = vmul.f32 %v188, 1.442695
    %v190 = vpow.pop %v189
    %v191 = vadd.f32 %v190, 1.0
    %v192 = vrcp.pop %v191
    %v193 = vmul.f32 %v191, %v192
    %v194 = vsub.f32 1.0, %v193
    %v195 = vmul.f32 %v192, %v194
    %v196 = vadd.f32 %v192, %v195
    %vm197 = vweird.f32 %v191
    %vm198 = vweird.f32 %v192
    %vm199 = vmor %vm197, %vm198
    %v200 = vsel %vm199, %v192, %v196
    %v201 = vand.u32 2147483647, %v191
    %vm202 = vcmp.eq.f32.partialorder %v201, 8.507059e+37
    %v203 = vand.u32 %v191, 2147483648
    %v204 = vor.u32 1.1754944e-38, %v203
    %v205 = vsel %vm202, %v204, %v200
    %v206 = vmul.f32 1.0, %v205
    %v211 = vunpack.c.l.b16 %v91
    %v212 = vunpack.c.l.b16 %v92
    %v213 = vunpack.c.l.b16 %v93
    %v214 = vunpack.c.l.b16 %v94
    %v215 = vpack.c.b16 %v212, %v211
    %v216 = vpack.c.b16 %v214, %v213
    %219 = vmatpush.bf16.msra.mxu0 0
    %220 = vmatpush.bf16.msra.mxu0 0
    %221 = vmatpush.bf16.msra.mxu0 0
    %222 = vmatpush.bf16.msra.mxu0 0
    %223 = vmatpush.bf16.msra.mxu0 0
    %224 = vmatpush.bf16.msra.mxu0 0
    %225 = vmatpush.bf16.msra.mxu0 %v216
    %226 = vmatpush.bf16.msra.mxu0 %v215
    %227 = vmatmul.bf16.gmra.mxu0 %v129
    %v228 = vpop.f32.mrf.mxu0
    %v229 = vadd.f32 %v106, %v228
    %v230 = vpop.f32.mrf.mxu0
    %231 = vdwg.mxu0
    %v232 = vmul.f32 %v187, %v229
    %v233 = vadd.f32 %v104, %v232
    %v234 = vtanh.pop %v233
    %v235 = vsub.f32 1.0, %v206
    %v236 = vmul.f32 %v235, %v234
    %v237 = vmul.f32 %v206, %v111
    %v238 = vadd.f32 %v236, %v237
    %v239 = vpack.c.bf16 %v238, %v238
    %v244 = vunpack.c.l.b16 %v95
    %v245 = vunpack.c.l.b16 %v96
    %v246 = vunpack.c.l.b16 %v97
    %v247 = vunpack.c.l.b16 %v98
    %v248 = vpack.c.b16 %v245, %v244
    %v249 = vpack.c.b16 %v247, %v246
    %v253 = vsel %vm127, %v239, 0
    %255 = vmatpush.bf16.msra.mxu0 0
    %256 = vmatpush.bf16.msra.mxu0 0
    %257 = vmatpush.bf16.msra.mxu0 0
    %258 = vmatpush.bf16.msra.mxu0 0
    %259 = vmatpush.bf16.msra.mxu0 0
    %260 = vmatpush.bf16.msra.mxu0 0
    %261 = vmatpush.bf16.msra.mxu0 %v249
    %262 = vmatpush.bf16.msra.mxu0 %v248
    %263 = vmatmul.bf16.gmra.mxu0 %v253
    %v264 = vpop.f32.mrf.mxu0
    %v265 = vadd.f32 %v109, %v264
    %v266 = vpop.f32.mrf.mxu0
    %267 = vdwg.mxu0
    %v268 = vld [vmem:[#allocation5] sm:$0x3]
    %v269 = vadd.f32 %v265, %v268
    %v271 = vshra.s32 %v269, 31
    %v272 = vand.u32 %v271, 2147483647
    %v273 = vxor.u32 %v269, %v272
    %v274 = vand.u32 %v273, 4294967280
    %v275 = vsub.s32 15, %v113
    %v276 = vor.u32 %v274, %v275
    %vm277 = vcmask 123904
    %v278 = vsel %vm277, %v276, 2147483648
    %v279 = vand.u32 %v278, 65535
    %v280 = vshra.s32 %v278, 16
    %v281 = vcvt.s32.f32 %v279
    %v282 = vcvt.s32.f32 %v280
    %283 = vmax.xlane.f32.xlu0 %v282
    %v284 = vpop.xlane.xlu0 %283
    %vm285 = vcmp.eq.f32.partialorder %v282, %v284
    %v286 = vsel %vm285, %v281, -inf
    %287 = vmax.xlane.f32.xlu0 %v286
    %v288 = vpop.xlane.xlu0 %287
    %v289 = vcvt.f32.s32 %v288
    %v290 = vcvt.f32.s32 %v284
    %v291 = vshll.u32 %v290, 16
    %v292 = vadd.s32 %v291, %v289
    %vm293 = vcmp.eq.s32.totalorder %v276, %v292
    %v294 = vsel %vm293, 1, 0
    %v295 = vcvt.s32.f32 %v294
    %v296 = vpack.c.bf16 %v295, %v295
    %v297 = vand.u32 %v292, 15
    %v298 = vsub.s32 15, %v297
    %vm299 = vcmp.eq.s32.totalorder %v113, %v298
    %v300 = vsel %vm299, 1.0, 0.0
    %301 = vmatpush.bf16.msra.mxu0 0
    %302 = vmatpush.bf16.msra.mxu0 0
    %303 = vmatpush.bf16.msra.mxu0 0
    %304 = vmatpush.bf16.msra.mxu0 0
    %305 = vmatpush.bf16.msra.mxu0 0
    %306 = vmatpush.bf16.msra.mxu0 0
    %307 = vmatpush.bf16.msra.mxu0 %v124
    %308 = vmatpush.bf16.msra.mxu0 %v123
    %309 = vmatmul.bf16.gmra.mxu0 %v253
    %v310 = vpop.f32.mrf.mxu0
    %v311 = vadd.f32 0.0, %v310
    %v312 = vpop.f32.mrf.mxu0
    %313 = vdwg.mxu0
    %314 = vmatpush.bf16.msra.mxu0 0
    %315 = vmatpush.bf16.msra.mxu0 0
    %316 = vmatpush.bf16.msra.mxu0 0
    %317 = vmatpush.bf16.msra.mxu0 0
    %318 = vmatpush.bf16.msra.mxu0 0
    %319 = vmatpush.bf16.msra.mxu0 0
    %320 = vmatpush.bf16.msra.mxu0 %v153
    %321 = vmatpush.bf16.msra.mxu0 %v152
    %322 = vmatmul.bf16.gmra.mxu0 %v253
    %v323 = vpop.f32.mrf.mxu0
    %v324 = vadd.f32 0.0, %v323
    %v325 = vpop.f32.mrf.mxu0
    %326 = vdwg.mxu0
    %v329 = vunpack.c.l.b16 %v73
    %v330 = vunpack.c.l.b16 %v74
    %v331 = vpack.c.b16 %v330, %v329
    %vm333 = vcmask 130048
    %v335 = vsel %vm333, %v296, 0
    %337 = vmatpush.bf16.msra.mxu0 0
    %338 = vmatpush.bf16.msra.mxu0 0
    %339 = vmatpush.bf16.msra.mxu0 0
    %340 = vmatpush.bf16.msra.mxu0 0
    %341 = vmatpush.bf16.msra.mxu0 0
    %342 = vmatpush.bf16.msra.mxu0 0
    %343 = vmatpush.bf16.msra.mxu0 0
    %344 = vmatpush.bf16.msra.mxu0 %v331
    %345 = vmatmul.bf16.gmra.mxu0 %v335
    %v346 = vpop.f32.mrf.mxu0
    %v347 = vadd.f32 %v311, %v346
    %v348 = vpop.f32.mrf.mxu0
    %349 = vdwg.mxu0
    %v350 = vadd.f32 %v347, %v100
    %v353 = vunpack.c.l.b16 %v76
    %v354 = vunpack.c.l.b16 %v77
    %v355 = vpack.c.b16 %v354, %v353
    %357 = vmatpush.bf16.msra.mxu0 0
    %358 = vmatpush.bf16.msra.mxu0 0
    %359 = vmatpush.bf16.msra.mxu0 0
    %360 = vmatpush.bf16.msra.mxu0 0
    %361 = vmatpush.bf16.msra.mxu0 0
    %362 = vmatpush.bf16.msra.mxu0 0
    %363 = vmatpush.bf16.msra.mxu0 0
    %364 = vmatpush.bf16.msra.mxu0 %v355
    %365 = vmatmul.bf16.gmra.mxu0 %v335
    %v366 = vpop.f32.mrf.mxu0
    %v367 = vadd.f32 %v324, %v366
    %v368 = vpop.f32.mrf.mxu0
    %369 = vdwg.mxu0
    %v370 = vadd.f32 %v367, %v102
    %v373 = vunpack.c.l.b16 %v79
    %v374 = vunpack.c.l.b16 %v80
    %v375 = vpack.c.b16 %v374, %v373
    %377 = vmatpush.bf16.msra.mxu0 0
    %378 = vmatpush.bf16.msra.mxu0 0
    %379 = vmatpush.bf16.msra.mxu0 0
    %380 = vmatpush.bf16.msra.mxu0 0
    %381 = vmatpush.bf16.msra.mxu0 0
    %382 = vmatpush.bf16.msra.mxu0 0
    %383 = vmatpush.bf16.msra.mxu0 0
    %384 = vmatpush.bf16.msra.mxu0 %v375
    %385 = vmatmul.bf16.gmra.mxu0 %v335
    %v386 = vpop.f32.mrf.mxu0
    %v387 = vadd.f32 %v104, %v386
    %v388 = vpop.f32.mrf.mxu0
    %389 = vdwg.mxu0
    %v390 = vxor.u32 %v350, 2147483648
    %v391 = vmul.f32 %v390, 1.442695
    %v392 = vpow.pop %v391
    %v393 = vadd.f32 %v392, 1.0
    %v394 = vrcp.pop %v393
    %v395 = vmul.f32 %v393, %v394
    %v396 = vsub.f32 1.0, %v395
    %v397 = vmul.f32 %v394, %v396
    %v398 = vadd.f32 %v394, %v397
    %vm399 = vweird.f32 %v393
    %vm400 = vweird.f32 %v394
    %vm401 = vmor %vm399, %vm400
    %v402 = vsel %vm401, %v394, %v398
    %v403 = vand.u32 2147483647, %v393
    %vm404 = vcmp.eq.f32.partialorder %v403, 8.507059e+37
    %v405 = vand.u32 %v393, 2147483648
    %v406 = vor.u32 1.1754944e-38, %v405
    %v407 = vsel %vm404, %v406, %v402
    %v408 = vmul.f32 1.0, %v407
    %v409 = vxor.u32 %v370, 2147483648
    %v410 = vmul.f32 %v409, 1.442695
    %v411 = vpow.pop %v410
    %v412 = vadd.f32 %v411, 1.0
    %v413 = vrcp.pop %v412
    %v414 = vmul.f32 %v412, %v413
    %v415 = vsub.f32 1.0, %v414
    %v416 = vmul.f32 %v413, %v415
    %v417 = vadd.f32 %v413, %v416
    %vm418 = vweird.f32 %v412
    %vm419 = vweird.f32 %v413
    %vm420 = vmor %vm418, %vm419
    %v421 = vsel %vm420, %v413, %v417
    %v422 = vand.u32 2147483647, %v412
    %vm423 = vcmp.eq.f32.partialorder %v422, 8.507059e+37
    %v424 = vand.u32 %v412, 2147483648
    %v425 = vor.u32 1.1754944e-38, %v424
    %v426 = vsel %vm423, %v425, %v421
    %v427 = vmul.f32 1.0, %v426
    %428 = vmatpush.bf16.msra.mxu0 0
    %429 = vmatpush.bf16.msra.mxu0 0
    %430 = vmatpush.bf16.msra.mxu0 0
    %431 = vmatpush.bf16.msra.mxu0 0
    %432 = vmatpush.bf16.msra.mxu0 0
    %433 = vmatpush.bf16.msra.mxu0 0
    %434 = vmatpush.bf16.msra.mxu0 %v216
    %435 = vmatpush.bf16.msra.mxu0 %v215
    %436 = vmatmul.bf16.gmra.mxu0 %v253
    %v437 = vpop.f32.mrf.mxu0
    %v438 = vadd.f32 %v106, %v437
    %v439 = vpop.f32.mrf.mxu0
    %440 = vdwg.mxu0
    %v441 = vmul.f32 %v408, %v438
    %v442 = vadd.f32 %v387, %v441
    %v443 = vtanh.pop %v442
    %v444 = vsub.f32 1.0, %v427
    %v445 = vmul.f32 %v444, %v443
    %v446 = vmul.f32 %v427, %v238
    %v447 = vadd.f32 %v445, %v446
    %v448 = vpack.c.bf16 %v447, %v447
    %v450 = vsel %vm127, %v448, 0
    %452 = vmatpush.bf16.msra.mxu0 0
    %453 = vmatpush.bf16.msra.mxu0 0
    %454 = vmatpush.bf16.msra.mxu0 0
    %455 = vmatpush.bf16.msra.mxu0 0
    %456 = vmatpush.bf16.msra.mxu0 0
    %457 = vmatpush.bf16.msra.mxu0 0
    %458 = vmatpush.bf16.msra.mxu0 %v249
    %459 = vmatpush.bf16.msra.mxu0 %v248
    %460 = vmatmul.bf16.gmra.mxu0 %v450
    %v461 = vpop.f32.mrf.mxu0
    %v462 = vadd.f32 %v109, %v461
    %v463 = vpop.f32.mrf.mxu0
    %464 = vdwg.mxu0
    %s465 = scalar_lea.vmem [#allocation5], 2
    %v466 = vld [vmem:[%s465] sm:$0x3]
    %v467 = vadd.f32 %v462, %v466
    %v469 = vshra.s32 %v467, 31
    %v470 = vand.u32 %v469, 2147483647
    %v471 = vxor.u32 %v467, %v470
    %v472 = vand.u32 %v471, 4294967280
    %v473 = vor.u32 %v472, %v275
    %v474 = vsel %vm277, %v473, 2147483648
    %v475 = vand.u32 %v474, 65535
    %v476 = vshra.s32 %v474, 16
    %v477 = vcvt.s32.f32 %v475
    %v478 = vcvt.s32.f32 %v476
    %479 = vmax.xlane.f32.xlu0 %v478
    %v480 = vpop.xlane.xlu0 %479
    %vm481 = vcmp.eq.f32.partialorder %v478, %v480
    %v482 = vsel %vm481, %v477, -inf
    %483 = vmax.xlane.f32.xlu0 %v482
    %v484 = vpop.xlane.xlu0 %483
    %v485 = vcvt.f32.s32 %v484
    %v486 = vcvt.f32.s32 %v480
    %v487 = vshll.u32 %v486, 16
    %v488 = vadd.s32 %v487, %v485
    %vm489 = vcmp.eq.s32.totalorder %v473, %v488
    %v490 = vsel %vm489, 1, 0
    %v491 = vcvt.s32.f32 %v490
    %v492 = vpack.c.bf16 %v491, %v491
    %v493 = vand.u32 %v488, 15
    %v494 = vsub.s32 31, %v493
    %vm495 = vcmp.eq.s32.totalorder %v113, %v494
    %v496 = vsel %vm495, 1.0, %v300
    %497 = vmatpush.bf16.msra.mxu0 0
    %498 = vmatpush.bf16.msra.mxu0 0
    %499 = vmatpush.bf16.msra.mxu0 0
    %500 = vmatpush.bf16.msra.mxu0 0
    %501 = vmatpush.bf16.msra.mxu0 0
    %502 = vmatpush.bf16.msra.mxu0 0
    %503 = vmatpush.bf16.msra.mxu0 %v124
    %504 = vmatpush.bf16.msra.mxu0 %v123
    %505 = vmatmul.bf16.gmra.mxu0 %v450
    %v506 = vpop.f32.mrf.mxu0
    %v507 = vadd.f32 0.0, %v506
    %v508 = vpop.f32.mrf.mxu0
    %509 = vdwg.mxu0
    %510 = vmatpush.bf16.msra.mxu0 0
    %511 = vmatpush.bf16.msra.mxu0 0
    %512 = vmatpush.bf16.msra.mxu0 0
    %513 = vmatpush.bf16.msra.mxu0 0
    %514 = vmatpush.bf16.msra.mxu0 0
    %515 = vmatpush.bf16.msra.mxu0 0
    %516 = vmatpush.bf16.msra.mxu0 %v153
    %517 = vmatpush.bf16.msra.mxu0 %v152
    %518 = vmatmul.bf16.gmra.mxu0 %v450
    %v519 = vpop.f32.mrf.mxu0
    %v520 = vadd.f32 0.0, %v519
    %v521 = vpop.f32.mrf.mxu0
    %522 = vdwg.mxu0
    %v524 = vsel %vm333, %v492, 0
    %526 = vmatpush.bf16.msra.mxu0 0
    %527 = vmatpush.bf16.msra.mxu0 0
    %528 = vmatpush.bf16.msra.mxu0 0
    %529 = vmatpush.bf16.msra.mxu0 0
    %530 = vmatpush.bf16.msra.mxu0 0
    %531 = vmatpush.bf16.msra.mxu0 0
    %532 = vmatpush.bf16.msra.mxu0 0
    %533 = vmatpush.bf16.msra.mxu0 %v331
    %534 = vmatmul.bf16.gmra.mxu0 %v524
    %v535 = vpop.f32.mrf.mxu0
    %v536 = vadd.f32 %v507, %v535
    %v537 = vpop.f32.mrf.mxu0
    %538 = vdwg.mxu0
    %v539 = vadd.f32 %v536, %v100
    %540 = vmatpush.bf16.msra.mxu0 0
    %541 = vmatpush.bf16.msra.mxu0 0
    %542 = vmatpush.bf16.msra.mxu0 0
    %543 = vmatpush.bf16.msra.mxu0 0
    %544 = vmatpush.bf16.msra.mxu0 0
    %545 = vmatpush.bf16.msra.mxu0 0
    %546 = vmatpush.bf16.msra.mxu0 0
    %547 = vmatpush.bf16.msra.mxu0 %v355
    %548 = vmatmul.bf16.gmra.mxu0 %v524
    %v549 = vpop.f32.mrf.mxu0
    %v550 = vadd.f32 %v520, %v549
    %v551 = vpop.f32.mrf.mxu0
    %552 = vdwg.mxu0
    %v553 = vadd.f32 %v550, %v102
    %554 = vmatpush.bf16.msra.mxu0 0
    %555 = vmatpush.bf16.msra.mxu0 0
    %556 = vmatpush.bf16.msra.mxu0 0
    %557 = vmatpush.bf16.msra.mxu0 0
    %558 = vmatpush.bf16.msra.mxu0 0
    %559 = vmatpush.bf16.msra.mxu0 0
    %560 = vmatpush.bf16.msra.mxu0 0
    %561 = vmatpush.bf16.msra.mxu0 %v375
    %562 = vmatmul.bf16.gmra.mxu0 %v524
    %v563 = vpop.f32.mrf.mxu0
    %v564 = vadd.f32 %v104, %v563
    %v565 = vpop.f32.mrf.mxu0
    %566 = vdwg.mxu0
    %v567 = vxor.u32 %v539, 2147483648
    %v568 = vmul.f32 %v567, 1.442695
    %v569 = vpow.pop %v568
    %v570 = vadd.f32 %v569, 1.0
    %v571 = vrcp.pop %v570
    %v572 = vmul.f32 %v570, %v571
    %v573 = vsub.f32 1.0, %v572
    %v574 = vmul.f32 %v571, %v573
    %v575 = vadd.f32 %v571, %v574
    %vm576 = vweird.f32 %v570
    %vm577 = vweird.f32 %v571
    %vm578 = vmor %vm576, %vm577
    %v579 = vsel %vm578, %v571, %v575
    %v580 = vand.u32 2147483647, %v570
    %vm581 = vcmp.eq.f32.partialorder %v580, 8.507059e+37
    %v582 = vand.u32 %v570, 2147483648
    %v583 = vor.u32 1.1754944e-38, %v582
    %v584 = vsel %vm581, %v583, %v579
    %v585 = vmul.f32 1.0, %v584
    %v586 = vxor.u32 %v553, 2147483648
    %v587 = vmul.f32 %v586, 1.442695
    %v588 = vpow.pop %v587
    %v589 = vadd.f32 %v588, 1.0
    %v590 = vrcp.pop %v589
    %v591 = vmul.f32 %v589, %v590
    %v592 = vsub.f32 1.0, %v591
    %v593 = vmul.f32 %v590, %v592
    %v594 = vadd.f32 %v590, %v593
    %vm595 = vweird.f32 %v589
    %vm596 = vweird.f32 %v590
    %vm597 = vmor %vm595, %vm596
    %v598 = vsel %vm597, %v590, %v594
    %v599 = vand.u32 2147483647, %v589
    %vm600 = vcmp.eq.f32.partialorder %v599, 8.507059e+37
    %v601 = vand.u32 %v589, 2147483648
    %v602 = vor.u32 1.1754944e-38, %v601
    %v603 = vsel %vm600, %v602, %v598
    %v604 = vmul.f32 1.0, %v603
    %605 = vmatpush.bf16.msra.mxu0 0
    %606 = vmatpush.bf16.msra.mxu0 0
    %607 = vmatpush.bf16.msra.mxu0 0
    %608 = vmatpush.bf16.msra.mxu0 0
    %609 = vmatpush.bf16.msra.mxu0 0
    %610 = vmatpush.bf16.msra.mxu0 0
    %611 = vmatpush.bf16.msra.mxu0 %v216
    %612 = vmatpush.bf16.msra.mxu0 %v215
    %613 = vmatmul.bf16.gmra.mxu0 %v450
    %v614 = vpop.f32.mrf.mxu0
    %v615 = vadd.f32 %v106, %v614
    %v616 = vpop.f32.mrf.mxu0
    %617 = vdwg.mxu0
    %v618 = vmul.f32 %v585, %v615
    %v619 = vadd.f32 %v564, %v618
    %v620 = vtanh.pop %v619
    %v621 = vsub.f32 1.0, %v604
    %v622 = vmul.f32 %v621, %v620
    %v623 = vmul.f32 %v604, %v447
    %v624 = vadd.f32 %v622, %v623
    %v625 = vpack.c.bf16 %v624, %v624
    %v627 = vsel %vm127, %v625, 0
    %629 = vmatpush.bf16.msra.mxu0 0
    %630 = vmatpush.bf16.msra.mxu0 0
    %631 = vmatpush.bf16.msra.mxu0 0
    %632 = vmatpush.bf16.msra.mxu0 0
    %633 = vmatpush.bf16.msra.mxu0 0
    %634 = vmatpush.bf16.msra.mxu0 0
    %635 = vmatpush.bf16.msra.mxu0 %v249
    %636 = vmatpush.bf16.msra.mxu0 %v248
    %637 = vmatmul.bf16.gmra.mxu0 %v627
    %v638 = vpop.f32.mrf.mxu0
    %v639 = vadd.f32 %v109, %v638
    %v640 = vpop.f32.mrf.mxu0
    %641 = vdwg.mxu0
    %s642 = scalar_lea.vmem [#allocation5], 4
    %v643 = vld [vmem:[%s642] sm:$0x3]
    %v644 = vadd.f32 %v639, %v643
    %v646 = vshra.s32 %v644, 31
    %v647 = vand.u32 %v646, 2147483647
    %v648 = vxor.u32 %v644, %v647
    %v649 = vand.u32 %v648, 4294967280
    %v650 = vor.u32 %v649, %v275
    %v651 = vsel %vm277, %v650, 2147483648
    %v652 = vand.u32 %v651, 65535
    %v653 = vshra.s32 %v651, 16
    %v654 = vcvt.s32.f32 %v652
    %v655 = vcvt.s32.f32 %v653
    %656 = vmax.xlane.f32.xlu0 %v655
    %v657 = vpop.xlane.xlu0 %656
    %vm658 = vcmp.eq.f32.partialorder %v655, %v657
    %v659 = vsel %vm658, %v654, -inf
    %660 = vmax.xlane.f32.xlu0 %v659
    %v661 = vpop.xlane.xlu0 %660
    %v662 = vcvt.f32.s32 %v661
    %v663 = vcvt.f32.s32 %v657
    %v664 = vshll.u32 %v663, 16
    %v665 = vadd.s32 %v664, %v662
    %vm666 = vcmp.eq.s32.totalorder %v650, %v665
    %v667 = vsel %vm666, 1, 0
    %v668 = vcvt.s32.f32 %v667
    %v669 = vpack.c.bf16 %v668, %v668
    %v670 = vand.u32 %v665, 15
    %v671 = vsub.s32 47, %v670
    %vm672 = vcmp.eq.s32.totalorder %v113, %v671
    %v673 = vsel %vm672, 1.0, %v496
    %674 = vmatpush.bf16.msra.mxu0 0
    %675 = vmatpush.bf16.msra.mxu0 0
    %676 = vmatpush.bf16.msra.mxu0 0
    %677 = vmatpush.bf16.msra.mxu0 0
    %678 = vmatpush.bf16.msra.mxu0 0
    %679 = vmatpush.bf16.msra.mxu0 0
    %680 = vmatpush.bf16.msra.mxu0 %v124
    %681 = vmatpush.bf16.msra.mxu0 %v123
    %682 = vmatmul.bf16.gmra.mxu0 %v627
    %v683 = vpop.f32.mrf.mxu0
    %v684 = vadd.f32 0.0, %v683
    %v685 = vpop.f32.mrf.mxu0
    %686 = vdwg.mxu0
    %687 = vmatpush.bf16.msra.mxu0 0
    %688 = vmatpush.bf16.msra.mxu0 0
    %689 = vmatpush.bf16.msra.mxu0 0
    %690 = vmatpush.bf16.msra.mxu0 0
    %691 = vmatpush.bf16.msra.mxu0 0
    %692 = vmatpush.bf16.msra.mxu0 0
    %693 = vmatpush.bf16.msra.mxu0 %v153
    %694 = vmatpush.bf16.msra.mxu0 %v152
    %695 = vmatmul.bf16.gmra.mxu0 %v627
    %v696 = vpop.f32.mrf.mxu0
    %v697 = vadd.f32 0.0, %v696
    %v698 = vpop.f32.mrf.mxu0
    %699 = vdwg.mxu0
    %v701 = vsel %vm333, %v669, 0
    %703 = vmatpush.bf16.msra.mxu0 0
    %704 = vmatpush.bf16.msra.mxu0 0
    %705 = vmatpush.bf16.msra.mxu0 0
    %706 = vmatpush.bf16.msra.mxu0 0
    %707 = vmatpush.bf16.msra.mxu0 0
    %708 = vmatpush.bf16.msra.mxu0 0
    %709 = vmatpush.bf16.msra.mxu0 0
    %710 = vmatpush.bf16.msra.mxu0 %v331
    %711 = vmatmul.bf16.gmra.mxu0 %v701
    %v712 = vpop.f32.mrf.mxu0
    %v713 = vadd.f32 %v684, %v712
    %v714 = vpop.f32.mrf.mxu0
    %715 = vdwg.mxu0
    %v716 = vadd.f32 %v713, %v100
    %717 = vmatpush.bf16.msra.mxu0 0
    %718 = vmatpush.bf16.msra.mxu0 0
    %719 = vmatpush.bf16.msra.mxu0 0
    %720 = vmatpush.bf16.msra.mxu0 0
    %721 = vmatpush.bf16.msra.mxu0 0
    %722 = vmatpush.bf16.msra.mxu0 0
    %723 = vmatpush.bf16.msra.mxu0 0
    %724 = vmatpush.bf16.msra.mxu0 %v355
    %725 = vmatmul.bf16.gmra.mxu0 %v701
    %v726 = vpop.f32.mrf.mxu0
    %v727 = vadd.f32 %v697, %v726
    %v728 = vpop.f32.mrf.mxu0
    %729 = vdwg.mxu0
    %v730 = vadd.f32 %v727, %v102
    %731 = vmatpush.bf16.msra.mxu0 0
    %732 = vmatpush.bf16.msra.mxu0 0
    %733 = vmatpush.bf16.msra.mxu0 0
    %734 = vmatpush.bf16.msra.mxu0 0
    %735 = vmatpush.bf16.msra.mxu0 0
    %736 = vmatpush.bf16.msra.mxu0 0
    %737 = vmatpush.bf16.msra.mxu0 0
    %738 = vmatpush.bf16.msra.mxu0 %v375
    %739 = vmatmul.bf16.gmra.mxu0 %v701
    %v740 = vpop.f32.mrf.mxu0
    %v741 = vadd.f32 %v104, %v740
    %v742 = vpop.f32.mrf.mxu0
    %743 = vdwg.mxu0
    %v744 = vxor.u32 %v716, 2147483648
    %v745 = vmul.f32 %v744, 1.442695
    %v746 = vpow.pop %v745
    %v747 = vadd.f32 %v746, 1.0
    %v748 = vrcp.pop %v747
    %v749 = vmul.f32 %v747, %v748
    %v750 = vsub.f32 1.0, %v749
    %v751 = vmul.f32 %v748, %v750
    %v752 = vadd.f32 %v748, %v751
    %vm753 = vweird.f32 %v747
    %vm754 = vweird.f32 %v748
    %vm755 = vmor %vm753, %vm754
    %v756 = vsel %vm755, %v748, %v752
    %v757 = vand.u32 2147483647, %v747
    %vm758 = vcmp.eq.f32.partialorder %v757, 8.507059e+37
    %v759 = vand.u32 %v747, 2147483648
    %v760 = vor.u32 1.1754944e-38, %v759
    %v761 = vsel %vm758, %v760, %v756
    %v762 = vmul.f32 1.0, %v761
    %v763 = vxor.u32 %v730, 2147483648
    %v764 = vmul.f32 %v763, 1.442695
    %v765 = vpow.pop %v764
    %v766 = vadd.f32 %v765, 1.0
    %v767 = vrcp.pop %v766
    %v768 = vmul.f32 %v766, %v767
    %v769 = vsub.f32 1.0, %v768
    %v770 = vmul.f32 %v767, %v769
    %v771 = vadd.f32 %v767, %v770
    %vm772 = vweird.f32 %v766
    %vm773 = vweird.f32 %v767
    %vm774 = vmor %vm772, %vm773
    %v775 = vsel %vm774, %v767, %v771
    %v776 = vand.u32 2147483647, %v766
    %vm777 = vcmp.eq.f32.partialorder %v776, 8.507059e+37
    %v778 = vand.u32 %v766, 2147483648
    %v779 = vor.u32 1.1754944e-38, %v778
    %v780 = vsel %vm777, %v779, %v775
    %v781 = vmul.f32 1.0, %v780
    %782 = vmatpush.bf16.msra.mxu0 0
    %783 = vmatpush.bf16.msra.mxu0 0
    %784 = vmatpush.bf16.msra.mxu0 0
    %785 = vmatpush.bf16.msra.mxu0 0
    %786 = vmatpush.bf16.msra.mxu0 0
    %787 = vmatpush.bf16.msra.mxu0 0
    %788 = vmatpush.bf16.msra.mxu0 %v216
    %789 = vmatpush.bf16.msra.mxu0 %v215
    %790 = vmatmul.bf16.gmra.mxu0 %v627
    %v791 = vpop.f32.mrf.mxu0
    %v792 = vadd.f32 %v106, %v791
    %v793 = vpop.f32.mrf.mxu0
    %794 = vdwg.mxu0
    %v795 = vmul.f32 %v762, %v792
    %v796 = vadd.f32 %v741, %v795
    %v797 = vtanh.pop %v796
    %v798 = vsub.f32 1.0, %v781
    %v799 = vmul.f32 %v798, %v797
    %v800 = vmul.f32 %v781, %v624
    %v801 = vadd.f32 %v799, %v800
    %v802 = vpack.c.bf16 %v801, %v801
    %v804 = vsel %vm127, %v802, 0
    %806 = vmatpush.bf16.msra.mxu0 0
    %807 = vmatpush.bf16.msra.mxu0 0
    %808 = vmatpush.bf16.msra.mxu0 0
    %809 = vmatpush.bf16.msra.mxu0 0
    %810 = vmatpush.bf16.msra.mxu0 0
    %811 = vmatpush.bf16.msra.mxu0 0
    %812 = vmatpush.bf16.msra.mxu0 %v249
    %813 = vmatpush.bf16.msra.mxu0 %v248
    %814 = vmatmul.bf16.gmra.mxu0 %v804
    %v815 = vpop.f32.mrf.mxu0
    %v816 = vadd.f32 %v109, %v815
    %v817 = vpop.f32.mrf.mxu0
    %818 = vdwg.mxu0
    %s819 = scalar_lea.vmem [#allocation5], 6
    %v820 = vld [vmem:[%s819] sm:$0x3]
    %v821 = vadd.f32 %v816, %v820
    %v823 = vshra.s32 %v821, 31
    %v824 = vand.u32 %v823, 2147483647
    %v825 = vxor.u32 %v821, %v824
    %v826 = vand.u32 %v825, 4294967280
    %v827 = vor.u32 %v826, %v275
    %v828 = vsel %vm277, %v827, 2147483648
    %v829 = vand.u32 %v828, 65535
    %v830 = vshra.s32 %v828, 16
    %v831 = vcvt.s32.f32 %v829
    %v832 = vcvt.s32.f32 %v830
    %833 = vmax.xlane.f32.xlu0 %v832
    %v834 = vpop.xlane.xlu0 %833
    %vm835 = vcmp.eq.f32.partialorder %v832, %v834
    %v836 = vsel %vm835, %v831, -inf
    %837 = vmax.xlane.f32.xlu0 %v836
    %v838 = vpop.xlane.xlu0 %837
    %v839 = vcvt.f32.s32 %v838
    %v840 = vcvt.f32.s32 %v834
    %v841 = vshll.u32 %v840, 16
    %v842 = vadd.s32 %v841, %v839
    %vm843 = vcmp.eq.s32.totalorder %v827, %v842
    %v844 = vsel %vm843, 1, 0
    %v845 = vcvt.s32.f32 %v844
    %v846 = vpack.c.bf16 %v845, %v845
    %v847 = vand.u32 %v842, 15
    %v848 = vsub.s32 63, %v847
    %vm849 = vcmp.eq.s32.totalorder %v113, %v848
    %v850 = vsel %vm849, 1.0, %v673
    %851 = vmatpush.bf16.msra.mxu0 0
    %852 = vmatpush.bf16.msra.mxu0 0
    %853 = vmatpush.bf16.msra.mxu0 0
    %854 = vmatpush.bf16.msra.mxu0 0
    %855 = vmatpush.bf16.msra.mxu0 0
    %856 = vmatpush.bf16.msra.mxu0 0
    %857 = vmatpush.bf16.msra.mxu0 %v124
    %858 = vmatpush.bf16.msra.mxu0 %v123
    %859 = vmatmul.bf16.gmra.mxu0 %v804
    %v860 = vpop.f32.mrf.mxu0
    %v861 = vadd.f32 0.0, %v860
    %v862 = vpop.f32.mrf.mxu0
    %863 = vdwg.mxu0
    %864 = vmatpush.bf16.msra.mxu0 0
    %865 = vmatpush.bf16.msra.mxu0 0
    %866 = vmatpush.bf16.msra.mxu0 0
    %867 = vmatpush.bf16.msra.mxu0 0
    %868 = vmatpush.bf16.msra.mxu0 0
    %869 = vmatpush.bf16.msra.mxu0 0
    %870 = vmatpush.bf16.msra.mxu0 %v153
    %871 = vmatpush.bf16.msra.mxu0 %v152
    %872 = vmatmul.bf16.gmra.mxu0 %v804
    %v873 = vpop.f32.mrf.mxu0
    %v874 = vadd.f32 0.0, %v873
    %v875 = vpop.f32.mrf.mxu0
    %876 = vdwg.mxu0
    %v878 = vsel %vm333, %v846, 0
    %880 = vmatpush.bf16.msra.mxu0 0
    %881 = vmatpush.bf16.msra.mxu0 0
    %882 = vmatpush.bf16.msra.mxu0 0
    %883 = vmatpush.bf16.msra.mxu0 0
    %884 = vmatpush.bf16.msra.mxu0 0
    %885 = vmatpush.bf16.msra.mxu0 0
    %886 = vmatpush.bf16.msra.mxu0 0
    %887 = vmatpush.bf16.msra.mxu0 %v331
    %888 = vmatmul.bf16.gmra.mxu0 %v878
    %v889 = vpop.f32.mrf.mxu0
    %v890 = vadd.f32 %v861, %v889
    %v891 = vpop.f32.mrf.mxu0
    %892 = vdwg.mxu0
    %v893 = vadd.f32 %v890, %v100
    %894 = vmatpush.bf16.msra.mxu0 0
    %895 = vmatpush.bf16.msra.mxu0 0
    %896 = vmatpush.bf16.msra.mxu0 0
    %897 = vmatpush.bf16.msra.mxu0 0
    %898 = vmatpush.bf16.msra.mxu0 0
    %899 = vmatpush.bf16.msra.mxu0 0
    %900 = vmatpush.bf16.msra.mxu0 0
    %901 = vmatpush.bf16.msra.mxu0 %v355
    %902 = vmatmul.bf16.gmra.mxu0 %v878
    %v903 = vpop.f32.mrf.mxu0
    %v904 = vadd.f32 %v874, %v903
    %v905 = vpop.f32.mrf.mxu0
    %906 = vdwg.mxu0
    %v907 = vadd.f32 %v904, %v102
    %908 = vmatpush.bf16.msra.mxu0 0
    %909 = vmatpush.bf16.msra.mxu0 0
    %910 = vmatpush.bf16.msra.mxu0 0
    %911 = vmatpush.bf16.msra.mxu0 0
    %912 = vmatpush.bf16.msra.mxu0 0
    %913 = vmatpush.bf16.msra.mxu0 0
    %914 = vmatpush.bf16.msra.mxu0 0
    %915 = vmatpush.bf16.msra.mxu0 %v375
    %916 = vmatmul.bf16.gmra.mxu0 %v878
    %v917 = vpop.f32.mrf.mxu0
    %v918 = vadd.f32 %v104, %v917
    %v919 = vpop.f32.mrf.mxu0
    %920 = vdwg.mxu0
    %v921 = vxor.u32 %v893, 2147483648
    %v922 = vmul.f32 %v921, 1.442695
    %v923 = vpow.pop %v922
    %v924 = vadd.f32 %v923, 1.0
    %v925 = vrcp.pop %v924
    %v926 = vmul.f32 %v924, %v925
    %v927 = vsub.f32 1.0, %v926
    %v928 = vmul.f32 %v925, %v927
    %v929 = vadd.f32 %v925, %v928
    %vm930 = vweird.f32 %v924
    %vm931 = vweird.f32 %v925
    %vm932 = vmor %vm930, %vm931
    %v933 = vsel %vm932, %v925, %v929
    %v934 = vand.u32 2147483647, %v924
    %vm935 = vcmp.eq.f32.partialorder %v934, 8.507059e+37
    %v936 = vand.u32 %v924, 2147483648
    %v937 = vor.u32 1.1754944e-38, %v936
    %v938 = vsel %vm935, %v937, %v933
    %v939 = vmul.f32 1.0, %v938
    %v940 = vxor.u32 %v907, 2147483648
    %v941 = vmul.f32 %v940, 1.442695
    %v942 = vpow.pop %v941
    %v943 = vadd.f32 %v942, 1.0
    %v944 = vrcp.pop %v943
    %v945 = vmul.f32 %v943, %v944
    %v946 = vsub.f32 1.0, %v945
    %v947 = vmul.f32 %v944, %v946
    %v948 = vadd.f32 %v944, %v947
    %vm949 = vweird.f32 %v943
    %vm950 = vweird.f32 %v944
    %vm951 = vmor %vm949, %vm950
    %v952 = vsel %vm951, %v944, %v948
    %v953 = vand.u32 2147483647, %v943
    %vm954 = vcmp.eq.f32.partialorder %v953, 8.507059e+37
    %v955 = vand.u32 %v943, 2147483648
    %v956 = vor.u32 1.1754944e-38, %v955
    %v957 = vsel %vm954, %v956, %v952
    %v958 = vmul.f32 1.0, %v957
    %959 = vmatpush.bf16.msra.mxu0 0
    %960 = vmatpush.bf16.msra.mxu0 0
    %961 = vmatpush.bf16.msra.mxu0 0
    %962 = vmatpush.bf16.msra.mxu0 0
    %963 = vmatpush.bf16.msra.mxu0 0
    %964 = vmatpush.bf16.msra.mxu0 0
    %965 = vmatpush.bf16.msra.mxu0 %v216
    %966 = vmatpush.bf16.msra.mxu0 %v215
    %967 = vmatmul.bf16.gmra.mxu0 %v804
    %v968 = vpop.f32.mrf.mxu0
    %v969 = vadd.f32 %v106, %v968
    %v970 = vpop.f32.mrf.mxu0
    %971 = vdwg.mxu0
    %v972 = vmul.f32 %v939, %v969
    %v973 = vadd.f32 %v918, %v972
    %v974 = vtanh.pop %v973
    %v975 = vsub.f32 1.0, %v958
    %v976 = vmul.f32 %v975, %v974
    %v977 = vmul.f32 %v958, %v801
    %v978 = vadd.f32 %v976, %v977
    %v979 = vpack.c.bf16 %v978, %v978
    %v981 = vsel %vm127, %v979, 0
    %983 = vmatpush.bf16.msra.mxu0 0
    %984 = vmatpush.bf16.msra.mxu0 0
    %985 = vmatpush.bf16.msra.mxu0 0
    %986 = vmatpush.bf16.msra.mxu0 0
    %987 = vmatpush.bf16.msra.mxu0 0
    %988 = vmatpush.bf16.msra.mxu0 0
    %989 = vmatpush.bf16.msra.mxu0 %v249
    %990 = vmatpush.bf16.msra.mxu0 %v248
    %991 = vmatmul.bf16.gmra.mxu0 %v981
    %v992 = vpop.f32.mrf.mxu0
    %v993 = vadd.f32 %v109, %v992
    %v994 = vpop.f32.mrf.mxu0
    %995 = vdwg.mxu0
    %s996 = scalar_lea.vmem [#allocation5], 8
    %v997 = vld [vmem:[%s996] sm:$0x3]
    %v998 = vadd.f32 %v993, %v997
    %v1000 = vshra.s32 %v998, 31
    %v1001 = vand.u32 %v1000, 2147483647
    %v1002 = vxor.u32 %v998, %v1001
    %v1003 = vand.u32 %v1002, 4294967280
    %v1004 = vor.u32 %v1003, %v275
    %v1005 = vsel %vm277, %v1004, 2147483648
    %v1006 = vand.u32 %v1005, 65535
    %v1007 = vshra.s32 %v1005, 16
    %v1008 = vcvt.s32.f32 %v1006
    %v1009 = vcvt.s32.f32 %v1007
    %1010 = vmax.xlane.f32.xlu0 %v1009
    %v1011 = vpop.xlane.xlu0 %1010
    %vm1012 = vcmp.eq.f32.partialorder %v1009, %v1011
    %v1013 = vsel %vm1012, %v1008, -inf
    %1014 = vmax.xlane.f32.xlu0 %v1013
    %v1015 = vpop.xlane.xlu0 %1014
    %v1016 = vcvt.f32.s32 %v1015
    %v1017 = vcvt.f32.s32 %v1011
    %v1018 = vshll.u32 %v1017, 16
    %v1019 = vadd.s32 %v1018, %v1016
    %vm1020 = vcmp.eq.s32.totalorder %v1004, %v1019
    %v1021 = vsel %vm1020, 1, 0
    %v1022 = vcvt.s32.f32 %v1021
    %v1023 = vpack.c.bf16 %v1022, %v1022
    %v1024 = vand.u32 %v1019, 15
    %v1025 = vsub.s32 79, %v1024
    %vm1026 = vcmp.eq.s32.totalorder %v113, %v1025
    %v1027 = vsel %vm1026, 1.0, %v850
    %1028 = vmatpush.bf16.msra.mxu0 0
    %1029 = vmatpush.bf16.msra.mxu0 0
    %1030 = vmatpush.bf16.msra.mxu0 0
    %1031 = vmatpush.bf16.msra.mxu0 0
    %1032 = vmatpush.bf16.msra.mxu0 0
    %1033 = vmatpush.bf16.msra.mxu0 0
    %1034 = vmatpush.bf16.msra.mxu0 %v124
    %1035 = vmatpush.bf16.msra.mxu0 %v123
    %1036 = vmatmul.bf16.gmra.mxu0 %v981
    %v1037 = vpop.f32.mrf.mxu0
    %v1038 = vadd.f32 0.0, %v1037
    %v1039 = vpop.f32.mrf.mxu0
    %1040 = vdwg.mxu0
    %1041 = vmatpush.bf16.msra.mxu0 0
    %1042 = vmatpush.bf16.msra.mxu0 0
    %1043 = vmatpush.bf16.msra.mxu0 0
    %1044 = vmatpush.bf16.msra.mxu0 0
    %1045 = vmatpush.bf16.msra.mxu0 0
    %1046 = vmatpush.bf16.msra.mxu0 0
    %1047 = vmatpush.bf16.msra.mxu0 %v153
    %1048 = vmatpush.bf16.msra.mxu0 %v152
    %1049 = vmatmul.bf16.gmra.mxu0 %v981
    %v1050 = vpop.f32.mrf.mxu0
    %v1051 = vadd.f32 0.0, %v1050
    %v1052 = vpop.f32.mrf.mxu0
    %1053 = vdwg.mxu0
    %v1055 = vsel %vm333, %v1023, 0
    %1057 = vmatpush.bf16.msra.mxu0 0
    %1058 = vmatpush.bf16.msra.mxu0 0
    %1059 = vmatpush.bf16.msra.mxu0 0
    %1060 = vmatpush.bf16.msra.mxu0 0
    %1061 = vmatpush.bf16.msra.mxu0 0
    %1062 = vmatpush.bf16.msra.mxu0 0
    %1063 = vmatpush.bf16.msra.mxu0 0
    %1064 = vmatpush.bf16.msra.mxu0 %v331
    %1065 = vmatmul.bf16.gmra.mxu0 %v1055
    %v1066 = vpop.f32.mrf.mxu0
    %v1067 = vadd.f32 %v1038, %v1066
    %v1068 = vpop.f32.mrf.mxu0
    %1069 = vdwg.mxu0
    %v1070 = vadd.f32 %v1067, %v100
    %1071 = vmatpush.bf16.msra.mxu0 0
    %1072 = vmatpush.bf16.msra.mxu0 0
    %1073 = vmatpush.bf16.msra.mxu0 0
    %1074 = vmatpush.bf16.msra.mxu0 0
    %1075 = vmatpush.bf16.msra.mxu0 0
    %1076 = vmatpush.bf16.msra.mxu0 0
    %1077 = vmatpush.bf16.msra.mxu0 0
    %1078 = vmatpush.bf16.msra.mxu0 %v355
    %1079 = vmatmul.bf16.gmra.mxu0 %v1055
    %v1080 = vpop.f32.mrf.mxu0
    %v1081 = vadd.f32 %v1051, %v1080
    %v1082 = vpop.f32.mrf.mxu0
    %1083 = vdwg.mxu0
    %v1084 = vadd.f32 %v1081, %v102
    %1085 = vmatpush.bf16.msra.mxu0 0
    %1086 = vmatpush.bf16.msra.mxu0 0
    %1087 = vmatpush.bf16.msra.mxu0 0
    %1088 = vmatpush.bf16.msra.mxu0 0
    %1089 = vmatpush.bf16.msra.mxu0 0
    %1090 = vmatpush.bf16.msra.mxu0 0
    %1091 = vmatpush.bf16.msra.mxu0 0
    %1092 = vmatpush.bf16.msra.mxu0 %v375
    %1093 = vmatmul.bf16.gmra.mxu0 %v1055
    %v1094 = vpop.f32.mrf.mxu0
    %v1095 = vadd.f32 %v104, %v1094
    %v1096 = vpop.f32.mrf.mxu0
    %1097 = vdwg.mxu0
    %v1098 = vxor.u32 %v1070, 2147483648
    %v1099 = vmul.f32 %v1098, 1.442695
    %v1100 = vpow.pop %v1099
    %v1101 = vadd.f32 %v1100, 1.0
    %v1102 = vrcp.pop %v1101
    %v1103 = vmul.f32 %v1101, %v1102
    %v1104 = vsub.f32 1.0, %v1103
    %v1105 = vmul.f32 %v1102, %v1104
    %v1106 = vadd.f32 %v1102, %v1105
    %vm1107 = vweird.f32 %v1101
    %vm1108 = vweird.f32 %v1102
    %vm1109 = vmor %vm1107, %vm1108
    %v1110 = vsel %vm1109, %v1102, %v1106
    %v1111 = vand.u32 2147483647, %v1101
    %vm1112 = vcmp.eq.f32.partialorder %v1111, 8.507059e+37
    %v1113 = vand.u32 %v1101, 2147483648
    %v1114 = vor.u32 1.1754944e-38, %v1113
    %v1115 = vsel %vm1112, %v1114, %v1110
    %v1116 = vmul.f32 1.0, %v1115
    %v1117 = vxor.u32 %v1084, 2147483648
    %v1118 = vmul.f32 %v1117, 1.442695
    %v1119 = vpow.pop %v1118
    %v1120 = vadd.f32 %v1119, 1.0
    %v1121 = vrcp.pop %v1120
    %v1122 = vmul.f32 %v1120, %v1121
    %v1123 = vsub.f32 1.0, %v1122
    %v1124 = vmul.f32 %v1121, %v1123
    %v1125 = vadd.f32 %v1121, %v1124
    %vm1126 = vweird.f32 %v1120
    %vm1127 = vweird.f32 %v1121
    %vm1128 = vmor %vm1126, %vm1127
    %v1129 = vsel %vm1128, %v1121, %v1125
    %v1130 = vand.u32 2147483647, %v1120
    %vm1131 = vcmp.eq.f32.partialorder %v1130, 8.507059e+37
    %v1132 = vand.u32 %v1120, 2147483648
    %v1133 = vor.u32 1.1754944e-38, %v1132
    %v1134 = vsel %vm1131, %v1133, %v1129
    %v1135 = vmul.f32 1.0, %v1134
    %1136 = vmatpush.bf16.msra.mxu0 0
    %1137 = vmatpush.bf16.msra.mxu0 0
    %1138 = vmatpush.bf16.msra.mxu0 0
    %1139 = vmatpush.bf16.msra.mxu0 0
    %1140 = vmatpush.bf16.msra.mxu0 0
    %1141 = vmatpush.bf16.msra.mxu0 0
    %1142 = vmatpush.bf16.msra.mxu0 %v216
    %1143 = vmatpush.bf16.msra.mxu0 %v215
    %1144 = vmatmul.bf16.gmra.mxu0 %v981
    %v1145 = vpop.f32.mrf.mxu0
    %v1146 = vadd.f32 %v106, %v1145
    %v1147 = vpop.f32.mrf.mxu0
    %1148 = vdwg.mxu0
    %v1149 = vmul.f32 %v1116, %v1146
    %v1150 = vadd.f32 %v1095, %v1149
    %v1151 = vtanh.pop %v1150
    %v1152 = vsub.f32 1.0, %v1135
    %v1153 = vmul.f32 %v1152, %v1151
    %v1154 = vmul.f32 %v1135, %v978
    %v1155 = vadd.f32 %v1153, %v1154
    %v1156 = vpack.c.bf16 %v1155, %v1155
    %v1158 = vsel %vm127, %v1156, 0
    %1160 = vmatpush.bf16.msra.mxu0 0
    %1161 = vmatpush.bf16.msra.mxu0 0
    %1162 = vmatpush.bf16.msra.mxu0 0
    %1163 = vmatpush.bf16.msra.mxu0 0
    %1164 = vmatpush.bf16.msra.mxu0 0
    %1165 = vmatpush.bf16.msra.mxu0 0
    %1166 = vmatpush.bf16.msra.mxu0 %v249
    %1167 = vmatpush.bf16.msra.mxu0 %v248
    %1168 = vmatmul.bf16.gmra.mxu0 %v1158
    %v1169 = vpop.f32.mrf.mxu0
    %v1170 = vadd.f32 %v109, %v1169
    %v1171 = vpop.f32.mrf.mxu0
    %1172 = vdwg.mxu0
    %s1173 = scalar_lea.vmem [#allocation5], 10
    %v1174 = vld [vmem:[%s1173] sm:$0x3]
    %v1175 = vadd.f32 %v1170, %v1174
    %v1177 = vshra.s32 %v1175, 31
    %v1178 = vand.u32 %v1177, 2147483647
    %v1179 = vxor.u32 %v1175, %v1178
    %v1180 = vand.u32 %v1179, 4294967280
    %v1181 = vor.u32 %v1180, %v275
    %v1182 = vsel %vm277, %v1181, 2147483648
    %v1183 = vand.u32 %v1182, 65535
    %v1184 = vshra.s32 %v1182, 16
    %v1185 = vcvt.s32.f32 %v1183
    %v1186 = vcvt.s32.f32 %v1184
    %1187 = vmax.xlane.f32.xlu0 %v1186
    %v1188 = vpop.xlane.xlu0 %1187
    %vm1189 = vcmp.eq.f32.partialorder %v1186, %v1188
    %v1190 = vsel %vm1189, %v1185, -inf
    %1191 = vmax.xlane.f32.xlu0 %v1190
    %v1192 = vpop.xlane.xlu0 %1191
    %v1193 = vcvt.f32.s32 %v1192
    %v1194 = vcvt.f32.s32 %v1188
    %v1195 = vshll.u32 %v1194, 16
    %v1196 = vadd.s32 %v1195, %v1193
    %vm1197 = vcmp.eq.s32.totalorder %v1181, %v1196
    %v1198 = vsel %vm1197, 1, 0
    %v1199 = vcvt.s32.f32 %v1198
    %v1200 = vpack.c.bf16 %v1199, %v1199
    %v1201 = vand.u32 %v1196, 15
    %v1202 = vsub.s32 95, %v1201
    %vm1203 = vcmp.eq.s32.totalorder %v113, %v1202
    %v1204 = vsel %vm1203, 1.0, %v1027
    %1205 = vmatpush.bf16.msra.mxu0 0
    %1206 = vmatpush.bf16.msra.mxu0 0
    %1207 = vmatpush.bf16.msra.mxu0 0
    %1208 = vmatpush.bf16.msra.mxu0 0
    %1209 = vmatpush.bf16.msra.mxu0 0
    %1210 = vmatpush.bf16.msra.mxu0 0
    %1211 = vmatpush.bf16.msra.mxu0 %v124
    %1212 = vmatpush.bf16.msra.mxu0 %v123
    %1213 = vmatmul.bf16.gmra.mxu0 %v1158
    %v1214 = vpop.f32.mrf.mxu0
    %v1215 = vadd.f32 0.0, %v1214
    %v1216 = vpop.f32.mrf.mxu0
    %1217 = vdwg.mxu0
    %1218 = vmatpush.bf16.msra.mxu0 0
    %1219 = vmatpush.bf16.msra.mxu0 0
    %1220 = vmatpush.bf16.msra.mxu0 0
    %1221 = vmatpush.bf16.msra.mxu0 0
    %1222 = vmatpush.bf16.msra.mxu0 0
    %1223 = vmatpush.bf16.msra.mxu0 0
    %1224 = vmatpush.bf16.msra.mxu0 %v153
    %1225 = vmatpush.bf16.msra.mxu0 %v152
    %1226 = vmatmul.bf16.gmra.mxu0 %v1158
    %v1227 = vpop.f32.mrf.mxu0
    %v1228 = vadd.f32 0.0, %v1227
    %v1229 = vpop.f32.mrf.mxu0
    %1230 = vdwg.mxu0
    %v1232 = vsel %vm333, %v1200, 0
    %1234 = vmatpush.bf16.msra.mxu0 0
    %1235 = vmatpush.bf16.msra.mxu0 0
    %1236 = vmatpush.bf16.msra.mxu0 0
    %1237 = vmatpush.bf16.msra.mxu0 0
    %1238 = vmatpush.bf16.msra.mxu0 0
    %1239 = vmatpush.bf16.msra.mxu0 0
    %1240 = vmatpush.bf16.msra.mxu0 0
    %1241 = vmatpush.bf16.msra.mxu0 %v331
    %1242 = vmatmul.bf16.gmra.mxu0 %v1232
    %v1243 = vpop.f32.mrf.mxu0
    %v1244 = vadd.f32 %v1215, %v1243
    %v1245 = vpop.f32.mrf.mxu0
    %1246 = vdwg.mxu0
    %v1247 = vadd.f32 %v1244, %v100
    %1248 = vmatpush.bf16.msra.mxu0 0
    %1249 = vmatpush.bf16.msra.mxu0 0
    %1250 = vmatpush.bf16.msra.mxu0 0
    %1251 = vmatpush.bf16.msra.mxu0 0
    %1252 = vmatpush.bf16.msra.mxu0 0
    %1253 = vmatpush.bf16.msra.mxu0 0
    %1254 = vmatpush.bf16.msra.mxu0 0
    %1255 = vmatpush.bf16.msra.mxu0 %v355
    %1256 = vmatmul.bf16.gmra.mxu0 %v1232
    %v1257 = vpop.f32.mrf.mxu0
    %v1258 = vadd.f32 %v1228, %v1257
    %v1259 = vpop.f32.mrf.mxu0
    %1260 = vdwg.mxu0
    %v1261 = vadd.f32 %v1258, %v102
    %1262 = vmatpush.bf16.msra.mxu0 0
    %1263 = vmatpush.bf16.msra.mxu0 0
    %1264 = vmatpush.bf16.msra.mxu0 0
    %1265 = vmatpush.bf16.msra.mxu0 0
    %1266 = vmatpush.bf16.msra.mxu0 0
    %1267 = vmatpush.bf16.msra.mxu0 0
    %1268 = vmatpush.bf16.msra.mxu0 0
    %1269 = vmatpush.bf16.msra.mxu0 %v375
    %1270 = vmatmul.bf16.gmra.mxu0 %v1232
    %v1271 = vpop.f32.mrf.mxu0
    %v1272 = vadd.f32 %v104, %v1271
    %v1273 = vpop.f32.mrf.mxu0
    %1274 = vdwg.mxu0
    %v1275 = vxor.u32 %v1247, 2147483648
    %v1276 = vmul.f32 %v1275, 1.442695
    %v1277 = vpow.pop %v1276
    %v1278 = vadd.f32 %v1277, 1.0
    %v1279 = vrcp.pop %v1278
    %v1280 = vmul.f32 %v1278, %v1279
    %v1281 = vsub.f32 1.0, %v1280
    %v1282 = vmul.f32 %v1279, %v1281
    %v1283 = vadd.f32 %v1279, %v1282
    %vm1284 = vweird.f32 %v1278
    %vm1285 = vweird.f32 %v1279
    %vm1286 = vmor %vm1284, %vm1285
    %v1287 = vsel %vm1286, %v1279, %v1283
    %v1288 = vand.u32 2147483647, %v1278
    %vm1289 = vcmp.eq.f32.partialorder %v1288, 8.507059e+37
    %v1290 = vand.u32 %v1278, 2147483648
    %v1291 = vor.u32 1.1754944e-38, %v1290
    %v1292 = vsel %vm1289, %v1291, %v1287
    %v1293 = vmul.f32 1.0, %v1292
    %v1294 = vxor.u32 %v1261, 2147483648
    %v1295 = vmul.f32 %v1294, 1.442695
    %v1296 = vpow.pop %v1295
    %v1297 = vadd.f32 %v1296, 1.0
    %v1298 = vrcp.pop %v1297
    %v1299 = vmul.f32 %v1297, %v1298
    %v1300 = vsub.f32 1.0, %v1299
    %v1301 = vmul.f32 %v1298, %v1300
    %v1302 = vadd.f32 %v1298, %v1301
    %vm1303 = vweird.f32 %v1297
    %vm1304 = vweird.f32 %v1298
    %vm1305 = vmor %vm1303, %vm1304
    %v1306 = vsel %vm1305, %v1298, %v1302
    %v1307 = vand.u32 2147483647, %v1297
    %vm1308 = vcmp.eq.f32.partialorder %v1307, 8.507059e+37
    %v1309 = vand.u32 %v1297, 2147483648
    %v1310 = vor.u32 1.1754944e-38, %v1309
    %v1311 = vsel %vm1308, %v1310, %v1306
    %v1312 = vmul.f32 1.0, %v1311
    %1313 = vmatpush.bf16.msra.mxu0 0
    %1314 = vmatpush.bf16.msra.mxu0 0
    %1315 = vmatpush.bf16.msra.mxu0 0
    %1316 = vmatpush.bf16.msra.mxu0 0
    %1317 = vmatpush.bf16.msra.mxu0 0
    %1318 = vmatpush.bf16.msra.mxu0 0
    %1319 = vmatpush.bf16.msra.mxu0 %v216
    %1320 = vmatpush.bf16.msra.mxu0 %v215
    %1321 = vmatmul.bf16.gmra.mxu0 %v1158
    %v1322 = vpop.f32.mrf.mxu0
    %v1323 = vadd.f32 %v106, %v1322
    %v1324 = vpop.f32.mrf.mxu0
    %1325 = vdwg.mxu0
    %v1326 = vmul.f32 %v1293, %v1323
    %v1327 = vadd.f32 %v1272, %v1326
    %v1328 = vtanh.pop %v1327
    %v1329 = vsub.f32 1.0, %v1312
    %v1330 = vmul.f32 %v1329, %v1328
    %v1331 = vmul.f32 %v1312, %v1155
    %v1332 = vadd.f32 %v1330, %v1331
    %v1333 = vpack.c.bf16 %v1332, %v1332
    %v1335 = vsel %vm127, %v1333, 0
    %1337 = vmatpush.bf16.msra.mxu0 0
    %1338 = vmatpush.bf16.msra.mxu0 0
    %1339 = vmatpush.bf16.msra.mxu0 0
    %1340 = vmatpush.bf16.msra.mxu0 0
    %1341 = vmatpush.bf16.msra.mxu0 0
    %1342 = vmatpush.bf16.msra.mxu0 0
    %1343 = vmatpush.bf16.msra.mxu0 %v249
    %1344 = vmatpush.bf16.msra.mxu0 %v248
    %1345 = vmatmul.bf16.gmra.mxu0 %v1335
    %v1346 = vpop.f32.mrf.mxu0
    %v1347 = vadd.f32 %v109, %v1346
    %v1348 = vpop.f32.mrf.mxu0
    %1349 = vdwg.mxu0
    %s1350 = scalar_lea.vmem [#allocation5], 12
    %v1351 = vld [vmem:[%s1350] sm:$0x3]
    %v1352 = vadd.f32 %v1347, %v1351
    %v1354 = vshra.s32 %v1352, 31
    %v1355 = vand.u32 %v1354, 2147483647
    %v1356 = vxor.u32 %v1352, %v1355
    %v1357 = vand.u32 %v1356, 4294967280
    %v1358 = vor.u32 %v1357, %v275
    %v1359 = vsel %vm277, %v1358, 2147483648
    %v1360 = vand.u32 %v1359, 65535
    %v1361 = vshra.s32 %v1359, 16
    %v1362 = vcvt.s32.f32 %v1360
    %v1363 = vcvt.s32.f32 %v1361
    %1364 = vmax.xlane.f32.xlu0 %v1363
    %v1365 = vpop.xlane.xlu0 %1364
    %vm1366 = vcmp.eq.f32.partialorder %v1363, %v1365
    %v1367 = vsel %vm1366, %v1362, -inf
    %1368 = vmax.xlane.f32.xlu0 %v1367
    %v1369 = vpop.xlane.xlu0 %1368
    %v1370 = vcvt.f32.s32 %v1369
    %v1371 = vcvt.f32.s32 %v1365
    %v1372 = vshll.u32 %v1371, 16
    %v1373 = vadd.s32 %v1372, %v1370
    %vm1374 = vcmp.eq.s32.totalorder %v1358, %v1373
    %v1375 = vsel %vm1374, 1, 0
    %v1376 = vcvt.s32.f32 %v1375
    %v1377 = vpack.c.bf16 %v1376, %v1376
    %v1378 = vand.u32 %v1373, 15
    %v1379 = vsub.s32 111, %v1378
    %vm1380 = vcmp.eq.s32.totalorder %v113, %v1379
    %v1381 = vsel %vm1380, 1.0, %v1204
    %1382 = vmatpush.bf16.msra.mxu0 0
    %1383 = vmatpush.bf16.msra.mxu0 0
    %1384 = vmatpush.bf16.msra.mxu0 0
    %1385 = vmatpush.bf16.msra.mxu0 0
    %1386 = vmatpush.bf16.msra.mxu0 0
    %1387 = vmatpush.bf16.msra.mxu0 0
    %1388 = vmatpush.bf16.msra.mxu0 %v124
    %1389 = vmatpush.bf16.msra.mxu0 %v123
    %1390 = vmatmul.bf16.gmra.mxu0 %v1335
    %v1391 = vpop.f32.mrf.mxu0
    %v1392 = vadd.f32 0.0, %v1391
    %v1393 = vpop.f32.mrf.mxu0
    %1394 = vdwg.mxu0
    %1395 = vmatpush.bf16.msra.mxu0 0
    %1396 = vmatpush.bf16.msra.mxu0 0
    %1397 = vmatpush.bf16.msra.mxu0 0
    %1398 = vmatpush.bf16.msra.mxu0 0
    %1399 = vmatpush.bf16.msra.mxu0 0
    %1400 = vmatpush.bf16.msra.mxu0 0
    %1401 = vmatpush.bf16.msra.mxu0 %v153
    %1402 = vmatpush.bf16.msra.mxu0 %v152
    %1403 = vmatmul.bf16.gmra.mxu0 %v1335
    %v1404 = vpop.f32.mrf.mxu0
    %v1405 = vadd.f32 0.0, %v1404
    %v1406 = vpop.f32.mrf.mxu0
    %1407 = vdwg.mxu0
    %v1409 = vsel %vm333, %v1377, 0
    %1411 = vmatpush.bf16.msra.mxu0 0
    %1412 = vmatpush.bf16.msra.mxu0 0
    %1413 = vmatpush.bf16.msra.mxu0 0
    %1414 = vmatpush.bf16.msra.mxu0 0
    %1415 = vmatpush.bf16.msra.mxu0 0
    %1416 = vmatpush.bf16.msra.mxu0 0
    %1417 = vmatpush.bf16.msra.mxu0 0
    %1418 = vmatpush.bf16.msra.mxu0 %v331
    %1419 = vmatmul.bf16.gmra.mxu0 %v1409
    %v1420 = vpop.f32.mrf.mxu0
    %v1421 = vadd.f32 %v1392, %v1420
    %v1422 = vpop.f32.mrf.mxu0
    %1423 = vdwg.mxu0
    %v1424 = vadd.f32 %v1421, %v100
    %1425 = vmatpush.bf16.msra.mxu0 0
    %1426 = vmatpush.bf16.msra.mxu0 0
    %1427 = vmatpush.bf16.msra.mxu0 0
    %1428 = vmatpush.bf16.msra.mxu0 0
    %1429 = vmatpush.bf16.msra.mxu0 0
    %1430 = vmatpush.bf16.msra.mxu0 0
    %1431 = vmatpush.bf16.msra.mxu0 0
    %1432 = vmatpush.bf16.msra.mxu0 %v355
    %1433 = vmatmul.bf16.gmra.mxu0 %v1409
    %v1434 = vpop.f32.mrf.mxu0
    %v1435 = vadd.f32 %v1405, %v1434
    %v1436 = vpop.f32.mrf.mxu0
    %1437 = vdwg.mxu0
    %v1438 = vadd.f32 %v1435, %v102
    %1439 = vmatpush.bf16.msra.mxu0 0
    %1440 = vmatpush.bf16.msra.mxu0 0
    %1441 = vmatpush.bf16.msra.mxu0 0
    %1442 = vmatpush.bf16.msra.mxu0 0
    %1443 = vmatpush.bf16.msra.mxu0 0
    %1444 = vmatpush.bf16.msra.mxu0 0
    %1445 = vmatpush.bf16.msra.mxu0 0
    %1446 = vmatpush.bf16.msra.mxu0 %v375
    %1447 = vmatmul.bf16.gmra.mxu0 %v1409
    %v1448 = vpop.f32.mrf.mxu0
    %v1449 = vadd.f32 %v104, %v1448
    %v1450 = vpop.f32.mrf.mxu0
    %1451 = vdwg.mxu0
    %v1452 = vxor.u32 %v1424, 2147483648
    %v1453 = vmul.f32 %v1452, 1.442695
    %v1454 = vpow.pop %v1453
    %v1455 = vadd.f32 %v1454, 1.0
    %v1456 = vrcp.pop %v1455
    %v1457 = vmul.f32 %v1455, %v1456
    %v1458 = vsub.f32 1.0, %v1457
    %v1459 = vmul.f32 %v1456, %v1458
    %v1460 = vadd.f32 %v1456, %v1459
    %vm1461 = vweird.f32 %v1455
    %vm1462 = vweird.f32 %v1456
    %vm1463 = vmor %vm1461, %vm1462
    %v1464 = vsel %vm1463, %v1456, %v1460
    %v1465 = vand.u32 2147483647, %v1455
    %vm1466 = vcmp.eq.f32.partialorder %v1465, 8.507059e+37
    %v1467 = vand.u32 %v1455, 2147483648
    %v1468 = vor.u32 1.1754944e-38, %v1467
    %v1469 = vsel %vm1466, %v1468, %v1464
    %v1470 = vmul.f32 1.0, %v1469
    %v1471 = vxor.u32 %v1438, 2147483648
    %v1472 = vmul.f32 %v1471, 1.442695
    %v1473 = vpow.pop %v1472
    %v1474 = vadd.f32 %v1473, 1.0
    %v1475 = vrcp.pop %v1474
    %v1476 = vmul.f32 %v1474, %v1475
    %v1477 = vsub.f32 1.0, %v1476
    %v1478 = vmul.f32 %v1475, %v1477
    %v1479 = vadd.f32 %v1475, %v1478
    %vm1480 = vweird.f32 %v1474
    %vm1481 = vweird.f32 %v1475
    %vm1482 = vmor %vm1480, %vm1481
    %v1483 = vsel %vm1482, %v1475, %v1479
    %v1484 = vand.u32 2147483647, %v1474
    %vm1485 = vcmp.eq.f32.partialorder %v1484, 8.507059e+37
    %v1486 = vand.u32 %v1474, 2147483648
    %v1487 = vor.u32 1.1754944e-38, %v1486
    %v1488 = vsel %vm1485, %v1487, %v1483
    %v1489 = vmul.f32 1.0, %v1488
    %1490 = vmatpush.bf16.msra.mxu0 0
    %1491 = vmatpush.bf16.msra.mxu0 0
    %1492 = vmatpush.bf16.msra.mxu0 0
    %1493 = vmatpush.bf16.msra.mxu0 0
    %1494 = vmatpush.bf16.msra.mxu0 0
    %1495 = vmatpush.bf16.msra.mxu0 0
    %1496 = vmatpush.bf16.msra.mxu0 %v216
    %1497 = vmatpush.bf16.msra.mxu0 %v215
    %1498 = vmatmul.bf16.gmra.mxu0 %v1335
    %v1499 = vpop.f32.mrf.mxu0
    %v1500 = vadd.f32 %v106, %v1499
    %v1501 = vpop.f32.mrf.mxu0
    %1502 = vdwg.mxu0
    %v1503 = vmul.f32 %v1470, %v1500
    %v1504 = vadd.f32 %v1449, %v1503
    %v1505 = vtanh.pop %v1504
    %v1506 = vsub.f32 1.0, %v1489
    %v1507 = vmul.f32 %v1506, %v1505
    %v1508 = vmul.f32 %v1489, %v1332
    %v1509 = vadd.f32 %v1507, %v1508
    %v1510 = vpack.c.bf16 %v1509, %v1509
    %v1512 = vsel %vm127, %v1510, 0
    %1514 = vmatpush.bf16.msra.mxu0 0
    %1515 = vmatpush.bf16.msra.mxu0 0
    %1516 = vmatpush.bf16.msra.mxu0 0
    %1517 = vmatpush.bf16.msra.mxu0 0
    %1518 = vmatpush.bf16.msra.mxu0 0
    %1519 = vmatpush.bf16.msra.mxu0 0
    %1520 = vmatpush.bf16.msra.mxu0 %v249
    %1521 = vmatpush.bf16.msra.mxu0 %v248
    %1522 = vmatmul.bf16.gmra.mxu0 %v1512
    %v1523 = vpop.f32.mrf.mxu0
    %v1524 = vadd.f32 %v109, %v1523
    %v1525 = vpop.f32.mrf.mxu0
    %1526 = vdwg.mxu0
    %s1527 = scalar_lea.vmem [#allocation5], 14
    %v1528 = vld [vmem:[%s1527] sm:$0x3]
    %v1529 = vadd.f32 %v1524, %v1528
    %v1531 = vshra.s32 %v1529, 31
    %v1532 = vand.u32 %v1531, 2147483647
    %v1533 = vxor.u32 %v1529, %v1532
    %v1534 = vand.u32 %v1533, 4294967280
    %v1535 = vor.u32 %v1534, %v275
    %v1536 = vsel %vm277, %v1535, 2147483648
    %v1537 = vand.u32 %v1536, 65535
    %v1538 = vshra.s32 %v1536, 16
    %v1539 = vcvt.s32.f32 %v1537
    %v1540 = vcvt.s32.f32 %v1538
    %1541 = vmax.xlane.f32.xlu0 %v1540
    %v1542 = vpop.xlane.xlu0 %1541
    %vm1543 = vcmp.eq.f32.partialorder %v1540, %v1542
    %v1544 = vsel %vm1543, %v1539, -inf
    %1545 = vmax.xlane.f32.xlu0 %v1544
    %v1546 = vpop.xlane.xlu0 %1545
    %v1547 = vcvt.f32.s32 %v1546
    %v1548 = vcvt.f32.s32 %v1542
    %v1549 = vshll.u32 %v1548, 16
    %v1550 = vadd.s32 %v1549, %v1547
    %v1551 = vand.u32 %v1550, 15
    %v1552 = vsub.s32 127, %v1551
    %vm1553 = vcmp.eq.s32.totalorder %v113, %v1552
    %v1554 = vsel %vm1553, 1.0, %v1381
    %1555 = vst [vmem:[#allocation8] sm:$0x3] %v1554
    // Predicated region
    $region42: #{tpu_custom_call.1} parent=1 // pred_check
      _
    $region43: #{tpu_custom_call.1} parent=1 // pred_check_branch
      %1557 = sbr.rel (0) target = $region45
    $region44: #{tpu_custom_call.1} parent=1 // pred_region
      %1559 = vsyncadd [#allocation4], 0
      %s1561 = sshll.u32 [#allocation8], 4
      %s1562 = int_to_ptr.vmem [resolvable:$true] %s1561
      %s1563 = sshll.u32 %s7, 4
      %s1564 = int_to_ptr.hbm [resolvable:$true] %s1563
      %1566 = dma.vmem_to_hbm [thread:$0]  %s1562, 32, %s1564, [#allocation4]
    $region45: #{tpu_custom_call.1} parent=1 // pred_fallthru
      _
    // Predicated region
    $region46: #{tpu_custom_call.1} parent=1 // pred_check
      _
    $region47: #{tpu_custom_call.1} parent=1 // pred_check_branch
      %1568 = sbr.rel (0) target = $region49
    $region48: #{tpu_custom_call.1} parent=1 // pred_region
      %1570 = dma.done [#allocation4], 32
    $region49: #{tpu_custom_call.1} parent=1 // pred_fallthru
      _
    %1571 = vsyncpa [#allocation3], 1
    %1572 = vsyncpa [#allocation6], 1
    %1573 = vsyncpa [#allocation4], 1

</llo_original>
